<compile_context>
chip_gen: v6e
topology: v6e:2x2x1
jax: 0.10.0
libtpu: 0.0.40
codegen_flags: <defaults>
</compile_context>

<pallas_src>
import functools

import jax
import jax.numpy as jnp
from jax.experimental import pallas as pl
from jax.experimental.pallas import tpu as pltpu


# --------------------------------------------------------------------------
# Fused kernel: MaxPool(2,2) -> 1x1 conv -> 2 x (BN -> 3x3 conv -> LeakyReLU
#               -> residual add), one batch tile of nb images per grid step.
# --------------------------------------------------------------------------
def _enc_disc_fused_kernel(x_ref, wc_ref, w3_ref, aff_ref, o_ref, pad_ref,
                           *, negative_slope):
    # x_ref  : (nb, Hh, 2, Wh, 2*C1) f32  -- bitcast-reshaped NHWC input
    # wc_ref : (C1, C2) bf16              -- 1x1 conv weight (Cin, Cout)
    # w3_ref : (2, 9*C2, C2) bf16         -- 3x3 conv weights, im2col layout
    # aff_ref: (8, C2) f32 rows: [bc, s1, t1, b1, s2, t2, b2, 0]
    #          s* = gamma/sqrt(var+eps), t* = beta - mean*s*, b* = conv bias
    # o_ref  : (nb, Hh, Wh, C2) f32
    # pad_ref: (nb, Hh+2, Wh+2, C2) f32 VMEM scratch (zero border = padding=1)
    nb, Hh, _, Wh, twoC1 = x_ref.shape
    C1 = twoC1 // 2
    C2 = o_ref.shape[-1]
    M = nb * Hh * Wh

    # Zero the scratch once per grid step (cheap memset).  Only the 1-wide
    # border is ever read as zero; the interior is rewritten by every layer.
    # (Re-done each step on purpose: correct under megacore grid partitioning.)
    pad_ref[...] = jnp.zeros_like(pad_ref)

    # ---- MaxPool2d(2, 2): two pairwise VPU maxima, no strided HBM access ---
    xh = jnp.maximum(x_ref[:, :, 0, :, :], x_ref[:, :, 1, :, :])   # H pairs
    pooled = jnp.maximum(xh[..., :C1], xh[..., C1:])               # W pairs

    # ---- 1x1 conv: one (M, C1) @ (C1, C2) MXU matmul, bf16 in / f32 acc ----
    y = jnp.dot(pooled.reshape(M, C1).astype(jnp.bfloat16), wc_ref[...],
                preferred_element_type=jnp.float32) + aff_ref[0:1, :]

    def res_layer(y, layer):
        scale = aff_ref[3 * layer + 1:3 * layer + 2, :]
        shift = aff_ref[3 * layer + 2:3 * layer + 3, :]
        bias = aff_ref[3 * layer + 3:3 * layer + 4, :]
        # eval-mode BatchNorm2d folded into a per-channel affine (f32 VPU).
        xb = y * scale + shift                                      # (M, C2)
        # padding=1: write the interior of the zero-bordered scratch.
        pad_ref[:, 1:Hh + 1, 1:Wh + 1, :] = xb.reshape(nb, Hh, Wh, C2)
        # im2col: 9 shifted 3x3-tap windows concatenated along lanes -> K=9*C2.
        cols = [pad_ref[:, dy:dy + Hh, dx:dx + Wh, :]
                for dy in range(3) for dx in range(3)]
        patches = jnp.concatenate(cols, axis=-1).reshape(M, 9 * C2)
        z = jnp.dot(patches.astype(jnp.bfloat16), w3_ref[layer],
                    preferred_element_type=jnp.float32) + bias
        z = jnp.maximum(z, negative_slope * z)      # LeakyReLU, slope in [0,1)
        return z + y                                                # residual

    y = res_layer(y, 0)
    y = res_layer(y, 1)

    o_ref[...] = y.reshape(nb, Hh, Wh, C2)


# --------------------------------------------------------------------------
# Wrappers (pallas_call plumbing)
# --------------------------------------------------------------------------
def _default_batch_tile(N, H, W, C1, C2):
    """Largest divisor of N that (a) leaves >=2 grid steps (v7x second core /
    DMA-compute pipelining) and (b) fits a conservative per-step VMEM budget."""
    Hh, Wh = H // 2, W // 2
    bytes_per_img = 4 * (2 * H * W * C1            # input block, double-buffered
                         + 2 * Hh * Wh * C2        # output block, double-buffered
                         + (Hh + 2) * (Wh + 2) * C2)  # pad scratch (f32)
    cap = max(1, (24 * 1024 * 1024) // max(bytes_per_img, 1))
    nb = 1
    for d in range(1, N + 1):
        if N % d == 0 and d <= cap and (N // d >= 2 or N == 1):
            nb = d
    return nb


def enc_disc_block_nhwc(x_nhwc, p, *, batch_tile=None, negative_slope=0.2):
    """EncDiscBlock forward on an NHWC tensor (preferred layout)."""
    x = x_nhwc.astype(jnp.float32)
    N, H, W, C1 = x.shape
    # TODO(synk): PyTorch MaxPool2d(2,2) floors odd spatial dims; not handled.
    assert H % 2 == 0 and W % 2 == 0, "MaxPool2d(2,2) path assumes even H, W"
    Hh, Wh = H // 2, W // 2
    C2 = p["wc"].shape[1]

    nb = batch_tile if batch_tile is not None else _default_batch_tile(N, H, W, C1, C2)
    assert N % nb == 0

    # Contiguous (metadata-only) reshape exposing the 2x2 pooling taps:
    # (N, H, W, C1) -> (N, Hh, 2, Wh, 2*C1).  No extra HBM copy.
    xr = x.reshape(N, Hh, 2, Wh, 2 * C1)

    # Pack the small per-channel vectors into one (8, C2) operand and the two
    # 3x3 weights into one (2, 9*C2, C2) operand: 3 input DMAs instead of 10.
    aff = jnp.concatenate(
        [p["bc"], p["l1_scale"], p["l1_shift"], p["l1_b"],
         p["l2_scale"], p["l2_shift"], p["l2_b"],
         jnp.zeros((1, C2), jnp.float32)], axis=0)           # (8, C2) f32
    w3 = jnp.stack([p["l1_w"], p["l2_w"]], axis=0)           # (2, 9*C2, C2) bf16

    kern = functools.partial(_enc_disc_fused_kernel,
                             negative_slope=negative_slope)
    return pl.pallas_call(
        kern,
        out_shape=jax.ShapeDtypeStruct((N, Hh, Wh, C2), jnp.float32),
        grid=(N // nb,),
        in_specs=[
            pl.BlockSpec((nb, Hh, 2, Wh, 2 * C1), lambda n: (n, 0, 0, 0, 0)),
            pl.BlockSpec((C1, C2), lambda n: (0, 0)),          # 1x1 weight
            pl.BlockSpec((2, 9 * C2, C2), lambda n: (0, 0, 0)),  # 3x3 weights
            pl.BlockSpec((8, C2), lambda n: (0, 0)),            # biases + BN
        ],
        out_specs=pl.BlockSpec((nb, Hh, Wh, C2), lambda n: (n, 0, 0, 0)),
        scratch_shapes=[pltpu.VMEM((nb, Hh + 2, Wh + 2, C2), jnp.float32)],
        compiler_params=pltpu.CompilerParams(
            dimension_semantics=("parallel",)),
    )(xr, p["wc"], w3, aff)


def enc_disc_block(x_nchw, p, **kw):
    """PyTorch-layout entry point: (N, C1, H, W) -> (N, C2, H//2, W//2)."""
    x = jnp.transpose(x_nchw, (0, 2, 3, 1))
    y = enc_disc_block_nhwc(x, p, **kw)
    return jnp.transpose(y, (0, 3, 1, 2))


# --------------------------------------------------------------------------
# Deterministic parameter init (synthetic; shapes follow the module __init__)
# --------------------------------------------------------------------------
def init_params(key, c1, c2, eps=1e-5):
    ks = jax.random.split(key, 8)

    def bn(k):
        kg, kb, km, kv = jax.random.split(k, 4)
        gamma = 1.0 + 0.1 * jax.random.normal(kg, (c2,))
        beta = 0.1 * jax.random.normal(kb, (c2,))
        mean = 0.1 * jax.random.normal(km, (c2,))
        var = jnp.abs(jax.random.normal(kv, (c2,))) + 0.5
        scale = gamma / jnp.sqrt(var + eps)
        shift = beta - mean * scale
        return (scale.reshape(1, c2).astype(jnp.float32),
                shift.reshape(1, c2).astype(jnp.float32))

    p = {}
    # 1x1 conv weight (Cin, Cout); MXU operands are stored bf16, biases f32.
    p["wc"] = (0.1 * jax.random.normal(ks[0], (c1, c2))).astype(jnp.bfloat16)
    p["bc"] = (0.1 * jax.random.normal(ks[1], (1, c2))).astype(jnp.float32)
    # 3x3 conv weights in im2col layout: (dy*3+dx, Cin, Cout) flat -> (9*Cin, Cout).
    p["l1_w"] = (0.05 * jax.random.normal(ks[2], (9 * c2, c2))).astype(jnp.bfloat16)
    p["l1_b"] = (0.1 * jax.random.normal(ks[3], (1, c2))).astype(jnp.float32)
    p["l1_scale"], p["l1_shift"] = bn(ks[4])
    p["l2_w"] = (0.05 * jax.random.normal(ks[5], (9 * c2, c2))).astype(jnp.bfloat16)
    p["l2_b"] = (0.1 * jax.random.normal(ks[6], (1, c2))).astype(jnp.float32)
    p["l2_scale"], p["l2_shift"] = bn(ks[7])
    return p


# --------------------------------------------------------------------------
# Pure-JAX reference (f32 math, same bf16-stored weights) for correctness
# --------------------------------------------------------------------------
def ref_forward(x_nchw, p):
    x = jnp.transpose(x_nchw, (0, 2, 3, 1)).astype(jnp.float32)
    N, H, W, C1 = x.shape
    y = x.reshape(N, H // 2, 2, W // 2, 2, C1).max(axis=(2, 4))   # MaxPool2d(2,2)
    y = jnp.einsum("nhwc,cd->nhwd", y, p["wc"].astype(jnp.float32)) + p["bc"][0]
    C2 = y.shape[-1]
    for lyr in ("l1", "l2"):
        xb = y * p[lyr + "_scale"][0] + p[lyr + "_shift"][0]
        w = p[lyr + "_w"].astype(jnp.float32).reshape(3, 3, C2, C2)  # HWIO
        z = jax.lax.conv_general_dilated(
            xb, w, window_strides=(1, 1), padding="SAME",
            dimension_numbers=("NHWC", "HWIO", "NHWC")) + p[lyr + "_b"][0]
        z = jnp.where(z > 0, z, 0.2 * z)
        y = z + y
    return jnp.transpose(y, (0, 3, 1, 2))


if __name__ == "__main__":
    key = jax.random.PRNGKey(0)
    kx, kp = jax.random.split(key)
    N, C1, C2, H, W = 2, 16, 32, 16, 16    # small shapes (encChannels1=16, encChannels2=32)
    x = jax.random.normal(kx, (N, C1, H, W), dtype=jnp.float32)
    params = init_params(kp, C1, C2)

    out = jax.block_until_ready(jax.jit(enc_disc_block)(x, params))
    assert out.shape == (N, C2, H // 2, W // 2), out.shape

    ref = ref_forward(x, params)
    err = float(jnp.max(jnp.abs(out - ref)))
    # bf16 MXU operands with f32 accumulation -> slightly relaxed tolerance.
    assert jnp.allclose(out, ref, atol=2e-2, rtol=2e-2), f"max abs err {err}"

    print("KERNEL_OK")
</pallas_src>

<mosaic_0001>
module attributes {stable_mosaic.version = 11 : i64} {
  func.func @_enc_disc_fused_kernel(%arg0: i32, %arg1: memref<1x8x2x8x32xf32, #tpu.memory_space<vmem>>, %arg2: memref<16x32xbf16, #tpu.memory_space<vmem>>, %arg3: memref<2x288x32xbf16, #tpu.memory_space<vmem>>, %arg4: memref<8x32xf32, #tpu.memory_space<vmem>>, %arg5: memref<1x8x8x32xf32, #tpu.memory_space<vmem>>, %arg6: memref<1x10x10x32xf32, #tpu.memory_space<vmem>>) attributes {dimension_semantics = [#tpu.dimension_semantics<parallel>], iteration_bounds = array<i64: 2>, scalar_prefetch = 0 : i64, scratch_operands = 1 : i64, tpu.core_type = #tpu.core_type<tc>, window_params = [{transform_indices = @transform_0, window_bounds = array<i64: 1, 8, 2, 8, 32>}, {pipeline_mode = #tpu.pipeline_mode<synchronous>, transform_indices = @transform_1, window_bounds = array<i64: 16, 32>}, {pipeline_mode = #tpu.pipeline_mode<synchronous>, transform_indices = @transform_2, window_bounds = array<i64: 2, 288, 32>}, {pipeline_mode = #tpu.pipeline_mode<synchronous>, transform_indices = @transform_3, window_bounds = array<i64: 8, 32>}, {transform_indices = @transform_4, window_bounds = array<i64: 1, 8, 8, 32>}]} {
    %cst = arith.constant 0.000000e+00 : f32
    %0 = vector.broadcast %cst : f32 to vector<1x10x10x32xf32>
    %c0 = arith.constant 0 : index
    %c0_0 = arith.constant 0 : index
    %c0_1 = arith.constant 0 : index
    %c0_2 = arith.constant 0 : index
    %1 = vector.load %arg6[%c0, %c0_0, %c0_1, %c0_2] : memref<1x10x10x32xf32, #tpu.memory_space<vmem>>, vector<1x10x10x32xf32>
    tpu.vector_store %arg6[%c0, %c0_0, %c0_1, %c0_2], %0 {strides = array<i32>} : memref<1x10x10x32xf32, #tpu.memory_space<vmem>>, vector<1x10x10x32xf32>,
    %c0_3 = arith.constant 0 : index
    %c0_4 = arith.constant 0 : index
    %c0_5 = arith.constant 0 : index
    %c0_6 = arith.constant 0 : index
    %c0_7 = arith.constant 0 : index
    %2 = vector.load %arg1[%c0_3, %c0_4, %c0_5, %c0_6, %c0_7] : memref<1x8x2x8x32xf32, #tpu.memory_space<vmem>>, vector<1x8x1x8x32xf32>
    %3 = vector.shape_cast %2 : vector<1x8x1x8x32xf32> to vector<1x8x8x32xf32>
    %c0_8 = arith.constant 0 : index
    %c0_9 = arith.constant 0 : index
    %c1 = arith.constant 1 : index
    %c0_10 = arith.constant 0 : index
    %c0_11 = arith.constant 0 : index
    %4 = vector.load %arg1[%c0_8, %c0_9, %c1, %c0_10, %c0_11] : memref<1x8x2x8x32xf32, #tpu.memory_space<vmem>>, vector<1x8x1x8x32xf32>
    %5 = vector.shape_cast %4 : vector<1x8x1x8x32xf32> to vector<1x8x8x32xf32>
    %6 = arith.maximumf %3, %5 : vector<1x8x8x32xf32>
    %7 = vector.extract_strided_slice %6 {offsets = [0, 0, 0, 0], sizes = [1, 8, 8, 16], strides = [1, 1, 1, 1]} : vector<1x8x8x32xf32> to vector<1x8x8x16xf32>
    %8 = vector.extract_strided_slice %6 {offsets = [0, 0, 0, 16], sizes = [1, 8, 8, 16], strides = [1, 1, 1, 1]} : vector<1x8x8x32xf32> to vector<1x8x8x16xf32>
    %9 = arith.maximumf %7, %8 : vector<1x8x8x16xf32>
    %10 = vector.shape_cast %9 : vector<1x8x8x16xf32> to vector<64x16xf32>
    %11 = arith.truncf %10 : vector<64x16xf32> to vector<64x16xbf16>
    %c0_12 = arith.constant 0 : index
    %c0_13 = arith.constant 0 : index
    %12 = vector.load %arg2[%c0_12, %c0_13] : memref<16x32xbf16, #tpu.memory_space<vmem>>, vector<16x32xbf16>
    %cst_14 = arith.constant dense<0.000000e+00> : vector<64x32xf32>
    %13 = tpu.matmul %11, %12, %cst_14 {dimension_numbers = #tpu.dot_dimension_numbers<[1], [0], [0], [1], [0, 0, 1, 1], [], []>} : vector<64x16xbf16>, vector<16x32xbf16>, vector<64x32xf32> -> vector<64x32xf32>
    %c0_15 = arith.constant 0 : index
    %c0_16 = arith.constant 0 : index
    %14 = vector.load %arg4[%c0_15, %c0_16] : memref<8x32xf32, #tpu.memory_space<vmem>>, vector<1x32xf32>
    %15 = vector.broadcast %14 : vector<1x32xf32> to vector<64x32xf32>
    %16 = arith.addf %13, %15 : vector<64x32xf32>
    %c1_17 = arith.constant 1 : index
    %c0_18 = arith.constant 0 : index
    %17 = vector.load %arg4[%c1_17, %c0_18] : memref<8x32xf32, #tpu.memory_space<vmem>>, vector<1x32xf32>
    %c2 = arith.constant 2 : index
    %c0_19 = arith.constant 0 : index
    %18 = vector.load %arg4[%c2, %c0_19] : memref<8x32xf32, #tpu.memory_space<vmem>>, vector<1x32xf32>
    %c3 = arith.constant 3 : index
    %c0_20 = arith.constant 0 : index
    %19 = vector.load %arg4[%c3, %c0_20] : memref<8x32xf32, #tpu.memory_space<vmem>>, vector<1x32xf32>
    %20 = vector.broadcast %17 : vector<1x32xf32> to vector<64x32xf32>
    %21 = arith.mulf %16, %20 : vector<64x32xf32>
    %22 = vector.broadcast %18 : vector<1x32xf32> to vector<64x32xf32>
    %23 = arith.addf %21, %22 : vector<64x32xf32>
    %24 = vector.shape_cast %23 : vector<64x32xf32> to vector<1x8x8x32xf32>
    %c0_21 = arith.constant 0 : index
    %c1_22 = arith.constant 1 : index
    %c1_23 = arith.constant 1 : index
    %c0_24 = arith.constant 0 : index
    %25 = vector.load %arg6[%c0_21, %c1_22, %c1_23, %c0_24] : memref<1x10x10x32xf32, #tpu.memory_space<vmem>>, vector<1x8x8x32xf32>
    tpu.vector_store %arg6[%c0_21, %c1_22, %c1_23, %c0_24], %24 {strides = array<i32>} : memref<1x10x10x32xf32, #tpu.memory_space<vmem>>, vector<1x8x8x32xf32>,
    %c0_25 = arith.constant 0 : index
    %c0_26 = arith.constant 0 : index
    %c0_27 = arith.constant 0 : index
    %c0_28 = arith.constant 0 : index
    %26 = vector.load %arg6[%c0_25, %c0_26, %c0_27, %c0_28] : memref<1x10x10x32xf32, #tpu.memory_space<vmem>>, vector<1x8x8x32xf32>
    %c0_29 = arith.constant 0 : index
    %c0_30 = arith.constant 0 : index
    %c1_31 = arith.constant 1 : index
    %c0_32 = arith.constant 0 : index
    %27 = vector.load %arg6[%c0_29, %c0_30, %c1_31, %c0_32] : memref<1x10x10x32xf32, #tpu.memory_space<vmem>>, vector<1x8x8x32xf32>
    %c0_33 = arith.constant 0 : index
    %c0_34 = arith.constant 0 : index
    %c2_35 = arith.constant 2 : index
    %c0_36 = arith.constant 0 : index
    %28 = vector.load %arg6[%c0_33, %c0_34, %c2_35, %c0_36] : memref<1x10x10x32xf32, #tpu.memory_space<vmem>>, vector<1x8x8x32xf32>
    %c0_37 = arith.constant 0 : index
    %c1_38 = arith.constant 1 : index
    %c0_39 = arith.constant 0 : index
    %c0_40 = arith.constant 0 : index
    %29 = vector.load %arg6[%c0_37, %c1_38, %c0_39, %c0_40] : memref<1x10x10x32xf32, #tpu.memory_space<vmem>>, vector<1x8x8x32xf32>
    %c0_41 = arith.constant 0 : index
    %c1_42 = arith.constant 1 : index
    %c1_43 = arith.constant 1 : index
    %c0_44 = arith.constant 0 : index
    %30 = vector.load %arg6[%c0_41, %c1_42, %c1_43, %c0_44] : memref<1x10x10x32xf32, #tpu.memory_space<vmem>>, vector<1x8x8x32xf32>
    %c0_45 = arith.constant 0 : index
    %c1_46 = arith.constant 1 : index
    %c2_47 = arith.constant 2 : index
    %c0_48 = arith.constant 0 : index
    %31 = vector.load %arg6[%c0_45, %c1_46, %c2_47, %c0_48] : memref<1x10x10x32xf32, #tpu.memory_space<vmem>>, vector<1x8x8x32xf32>
    %c0_49 = arith.constant 0 : index
    %c2_50 = arith.constant 2 : index
    %c0_51 = arith.constant 0 : index
    %c0_52 = arith.constant 0 : index
    %32 = vector.load %arg6[%c0_49, %c2_50, %c0_51, %c0_52] : memref<1x10x10x32xf32, #tpu.memory_space<vmem>>, vector<1x8x8x32xf32>
    %c0_53 = arith.constant 0 : index
    %c2_54 = arith.constant 2 : index
    %c1_55 = arith.constant 1 : index
    %c0_56 = arith.constant 0 : index
    %33 = vector.load %arg6[%c0_53, %c2_54, %c1_55, %c0_56] : memref<1x10x10x32xf32, #tpu.memory_space<vmem>>, vector<1x8x8x32xf32>
    %c0_57 = arith.constant 0 : index
    %c2_58 = arith.constant 2 : index
    %c2_59 = arith.constant 2 : index
    %c0_60 = arith.constant 0 : index
    %34 = vector.load %arg6[%c0_57, %c2_58, %c2_59, %c0_60] : memref<1x10x10x32xf32, #tpu.memory_space<vmem>>, vector<1x8x8x32xf32>
    %35 = tpu.concatenate %26, %27, %28, %29, %30, %31, %32, %33, %34 in 3 : vector<1x8x8x32xf32>, vector<1x8x8x32xf32>, vector<1x8x8x32xf32>, vector<1x8x8x32xf32>, vector<1x8x8x32xf32>, vector<1x8x8x32xf32>, vector<1x8x8x32xf32>, vector<1x8x8x32xf32>, vector<1x8x8x32xf32> -> vector<1x8x8x288xf32>
    %36 = vector.shape_cast %35 : vector<1x8x8x288xf32> to vector<64x288xf32>
    %37 = arith.truncf %36 : vector<64x288xf32> to vector<64x288xbf16>
    %c0_61 = arith.constant 0 : index
    %c0_62 = arith.constant 0 : index
    %c0_63 = arith.constant 0 : index
    %38 = vector.load %arg3[%c0_61, %c0_62, %c0_63] : memref<2x288x32xbf16, #tpu.memory_space<vmem>>, vector<1x288x32xbf16>
    %39 = vector.shape_cast %38 : vector<1x288x32xbf16> to vector<288x32xbf16>
    %cst_64 = arith.constant dense<0.000000e+00> : vector<64x32xf32>
    %40 = tpu.matmul %37, %39, %cst_64 {dimension_numbers = #tpu.dot_dimension_numbers<[1], [0], [0], [1], [0, 0, 1, 1], [], []>} : vector<64x288xbf16>, vector<288x32xbf16>, vector<64x32xf32> -> vector<64x32xf32>
    %41 = vector.broadcast %19 : vector<1x32xf32> to vector<64x32xf32>
    %42 = arith.addf %40, %41 : vector<64x32xf32>
    %cst_65 = arith.constant 2.000000e-01 : f32
    %43 = vector.broadcast %cst_65 : f32 to vector<64x32xf32>
    %44 = arith.mulf %43, %42 : vector<64x32xf32>
    %45 = arith.maximumf %42, %44 : vector<64x32xf32>
    %46 = arith.addf %45, %16 : vector<64x32xf32>
    %c4 = arith.constant 4 : index
    %c0_66 = arith.constant 0 : index
    %47 = vector.load %arg4[%c4, %c0_66] : memref<8x32xf32, #tpu.memory_space<vmem>>, vector<1x32xf32>
    %c5 = arith.constant 5 : index
    %c0_67 = arith.constant 0 : index
    %48 = vector.load %arg4[%c5, %c0_67] : memref<8x32xf32, #tpu.memory_space<vmem>>, vector<1x32xf32>
    %c6 = arith.constant 6 : index
    %c0_68 = arith.constant 0 : index
    %49 = vector.load %arg4[%c6, %c0_68] : memref<8x32xf32, #tpu.memory_space<vmem>>, vector<1x32xf32>
    %50 = vector.broadcast %47 : vector<1x32xf32> to vector<64x32xf32>
    %51 = arith.mulf %46, %50 : vector<64x32xf32>
    %52 = vector.broadcast %48 : vector<1x32xf32> to vector<64x32xf32>
    %53 = arith.addf %51, %52 : vector<64x32xf32>
    %54 = vector.shape_cast %53 : vector<64x32xf32> to vector<1x8x8x32xf32>
    %c0_69 = arith.constant 0 : index
    %c1_70 = arith.constant 1 : index
    %c1_71 = arith.constant 1 : index
    %c0_72 = arith.constant 0 : index
    %55 = vector.load %arg6[%c0_69, %c1_70, %c1_71, %c0_72] : memref<1x10x10x32xf32, #tpu.memory_space<vmem>>, vector<1x8x8x32xf32>
    tpu.vector_store %arg6[%c0_69, %c1_70, %c1_71, %c0_72], %54 {strides = array<i32>} : memref<1x10x10x32xf32, #tpu.memory_space<vmem>>, vector<1x8x8x32xf32>,
    %c0_73 = arith.constant 0 : index
    %c0_74 = arith.constant 0 : index
    %c0_75 = arith.constant 0 : index
    %c0_76 = arith.constant 0 : index
    %56 = vector.load %arg6[%c0_73, %c0_74, %c0_75, %c0_76] : memref<1x10x10x32xf32, #tpu.memory_space<vmem>>, vector<1x8x8x32xf32>
    %c0_77 = arith.constant 0 : index
    %c0_78 = arith.constant 0 : index
    %c1_79 = arith.constant 1 : index
    %c0_80 = arith.constant 0 : index
    %57 = vector.load %arg6[%c0_77, %c0_78, %c1_79, %c0_80] : memref<1x10x10x32xf32, #tpu.memory_space<vmem>>, vector<1x8x8x32xf32>
    %c0_81 = arith.constant 0 : index
    %c0_82 = arith.constant 0 : index
    %c2_83 = arith.constant 2 : index
    %c0_84 = arith.constant 0 : index
    %58 = vector.load %arg6[%c0_81, %c0_82, %c2_83, %c0_84] : memref<1x10x10x32xf32, #tpu.memory_space<vmem>>, vector<1x8x8x32xf32>
    %c0_85 = arith.constant 0 : index
    %c1_86 = arith.constant 1 : index
    %c0_87 = arith.constant 0 : index
    %c0_88 = arith.constant 0 : index
    %59 = vector.load %arg6[%c0_85, %c1_86, %c0_87, %c0_88] : memref<1x10x10x32xf32, #tpu.memory_space<vmem>>, vector<1x8x8x32xf32>
    %c0_89 = arith.constant 0 : index
    %c1_90 = arith.constant 1 : index
    %c1_91 = arith.constant 1 : index
    %c0_92 = arith.constant 0 : index
    %60 = vector.load %arg6[%c0_89, %c1_90, %c1_91, %c0_92] : memref<1x10x10x32xf32, #tpu.memory_space<vmem>>, vector<1x8x8x32xf32>
    %c0_93 = arith.constant 0 : index
    %c1_94 = arith.constant 1 : index
    %c2_95 = arith.constant 2 : index
    %c0_96 = arith.constant 0 : index
    %61 = vector.load %arg6[%c0_93, %c1_94, %c2_95, %c0_96] : memref<1x10x10x32xf32, #tpu.memory_space<vmem>>, vector<1x8x8x32xf32>
    %c0_97 = arith.constant 0 : index
    %c2_98 = arith.constant 2 : index
    %c0_99 = arith.constant 0 : index
    %c0_100 = arith.constant 0 : index
    %62 = vector.load %arg6[%c0_97, %c2_98, %c0_99, %c0_100] : memref<1x10x10x32xf32, #tpu.memory_space<vmem>>, vector<1x8x8x32xf32>
    %c0_101 = arith.constant 0 : index
    %c2_102 = arith.constant 2 : index
    %c1_103 = arith.constant 1 : index
    %c0_104 = arith.constant 0 : index
    %63 = vector.load %arg6[%c0_101, %c2_102, %c1_103, %c0_104] : memref<1x10x10x32xf32, #tpu.memory_space<vmem>>, vector<1x8x8x32xf32>
    %c0_105 = arith.constant 0 : index
    %c2_106 = arith.constant 2 : index
    %c2_107 = arith.constant 2 : index
    %c0_108 = arith.constant 0 : index
    %64 = vector.load %arg6[%c0_105, %c2_106, %c2_107, %c0_108] : memref<1x10x10x32xf32, #tpu.memory_space<vmem>>, vector<1x8x8x32xf32>
    %65 = tpu.concatenate %56, %57, %58, %59, %60, %61, %62, %63, %64 in 3 : vector<1x8x8x32xf32>, vector<1x8x8x32xf32>, vector<1x8x8x32xf32>, vector<1x8x8x32xf32>, vector<1x8x8x32xf32>, vector<1x8x8x32xf32>, vector<1x8x8x32xf32>, vector<1x8x8x32xf32>, vector<1x8x8x32xf32> -> vector<1x8x8x288xf32>
    %66 = vector.shape_cast %65 : vector<1x8x8x288xf32> to vector<64x288xf32>
    %67 = arith.truncf %66 : vector<64x288xf32> to vector<64x288xbf16>
    %c1_109 = arith.constant 1 : index
    %c0_110 = arith.constant 0 : index
    %c0_111 = arith.constant 0 : index
    %68 = vector.load %arg3[%c1_109, %c0_110, %c0_111] : memref<2x288x32xbf16, #tpu.memory_space<vmem>>, vector<1x288x32xbf16>
    %69 = vector.shape_cast %68 : vector<1x288x32xbf16> to vector<288x32xbf16>
    %cst_112 = arith.constant dense<0.000000e+00> : vector<64x32xf32>
    %70 = tpu.matmul %67, %69, %cst_112 {dimension_numbers = #tpu.dot_dimension_numbers<[1], [0], [0], [1], [0, 0, 1, 1], [], []>} : vector<64x288xbf16>, vector<288x32xbf16>, vector<64x32xf32> -> vector<64x32xf32>
    %71 = vector.broadcast %49 : vector<1x32xf32> to vector<64x32xf32>
    %72 = arith.addf %70, %71 : vector<64x32xf32>
    %cst_113 = arith.constant 2.000000e-01 : f32
    %73 = vector.broadcast %cst_113 : f32 to vector<64x32xf32>
    %74 = arith.mulf %73, %72 : vector<64x32xf32>
    %75 = arith.maximumf %72, %74 : vector<64x32xf32>
    %76 = arith.addf %75, %46 : vector<64x32xf32>
    %77 = vector.shape_cast %76 : vector<64x32xf32> to vector<1x8x8x32xf32>
    %c0_114 = arith.constant 0 : index
    %c0_115 = arith.constant 0 : index
    %c0_116 = arith.constant 0 : index
    %c0_117 = arith.constant 0 : index
    %78 = vector.load %arg5[%c0_114, %c0_115, %c0_116, %c0_117] : memref<1x8x8x32xf32, #tpu.memory_space<vmem>>, vector<1x8x8x32xf32>
    tpu.vector_store %arg5[%c0_114, %c0_115, %c0_116, %c0_117], %77 {strides = array<i32>} : memref<1x8x8x32xf32, #tpu.memory_space<vmem>>, vector<1x8x8x32xf32>,
    return
  }
  func.func @transform_0(%arg0: i32) -> (i32, i32, i32, i32, i32) {
    %c0_i32 = arith.constant 0 : i32
    %c0_i32_0 = arith.constant 0 : i32
    %c0_i32_1 = arith.constant 0 : i32
    %c0_i32_2 = arith.constant 0 : i32
    %c0_i32_3 = arith.constant 0 : i32
    return %arg0, %c0_i32, %c0_i32_0, %c0_i32_1, %c0_i32_2 : i32, i32, i32, i32, i32
  }
  func.func @transform_1(%arg0: i32) -> (i32, i32) {
    %c0_i32 = arith.constant 0 : i32
    %c0_i32_0 = arith.constant 0 : i32
    %c0_i32_1 = arith.constant 0 : i32
    return %c0_i32, %c0_i32_0 : i32, i32
  }
  func.func @transform_2(%arg0: i32) -> (i32, i32, i32) {
    %c0_i32 = arith.constant 0 : i32
    %c0_i32_0 = arith.constant 0 : i32
    %c0_i32_1 = arith.constant 0 : i32
    %c0_i32_2 = arith.constant 0 : i32
    return %c0_i32, %c0_i32_0, %c0_i32_1 : i32, i32, i32
  }
  func.func @transform_3(%arg0: i32) -> (i32, i32) {
    %c0_i32 = arith.constant 0 : i32
    %c0_i32_0 = arith.constant 0 : i32
    %c0_i32_1 = arith.constant 0 : i32
    return %c0_i32, %c0_i32_0 : i32, i32
  }
  func.func @transform_4(%arg0: i32) -> (i32, i32, i32, i32) {
    %c0_i32 = arith.constant 0 : i32
    %c0_i32_0 = arith.constant 0 : i32
    %c0_i32_1 = arith.constant 0 : i32
    %c0_i32_2 = arith.constant 0 : i32
    return %arg0, %c0_i32, %c0_i32_0, %c0_i32_1 : i32, i32, i32, i32
  }
}

</mosaic_0001>

<llo_original>
// kernel: enc_disc_block.1
$region0: #{enc_disc_block.1}
  #allocation0 [shape = 'u32[]', space=smem, size = 0x4, offset = 0x4, fixed_abs, tag = 'smem constant byte address 0x4 - core index']
  #allocation1 [shape = 'u32[144,128]{1,0:T(1,128)}', space=vmem, size = 0x12000, scoped, tag = 'internal scratch']
  #allocation2 [shape = 'f32[1,10,10,32]{3,2,1,0:T(8,128)}', space=vmem, size = 0x14000, scoped, tag = 'scratch operand']
  %s0 = inlined_call_operand.vmem [shape: f32[2,8,2,8,32], index: 0, kind: input, shape index: {}]
  %s1 = inlined_call_operand.vmem [shape: bf16[16,32], index: 1, kind: input, shape index: {}]
  %s2 = inlined_call_operand.vmem [shape: bf16[2,288,32], index: 2, kind: input, shape index: {}]
  %s3 = inlined_call_operand.vmem [shape: f32[8,32], index: 3, kind: input, shape index: {}]
  %s4 = inlined_call_operand.hbm [shape: f32[2,8,8,32], index: 4, kind: output, shape index: {}]
  %s5 = sld [smem:[#allocation0]]
  $region49: #{enc_disc_block.1} parent=0
    _
  %s7 = ssub.s32 1, %s5
  %s8 = scalar_select 0, %s7, %s5
  $region1: #{enc_disc_block.1} parent=0
    #allocation3 [shape = 'u8[65536]{0}', space=vmem, size = 0x10000, scoped, tag = 'output window, operand 0']
    #allocation4 [shape = 's32[2]{0}', space=sflag, size = 0x8, scoped, tag = 'scoped memory for enc_disc_block.1']
    %9 = vsyncpa [#allocation4], 0
    %s10 = scalar_lea.sflag [#allocation4], 1
    %11 = vsyncpa %s10, 0
    loop: start=0, step=1, limit=4
    $region2: #{enc_disc_block.1} parent=1 // loop_pre_header
      _
    $region3: #{enc_disc_block.1} parent=1 // loop_header
      %s13 = sphi 0, %s17
      %p14 = scmp.ge.s32.totalorder %s13, 4
      %s23 = sphi 0, %s25
      %s26 = sphi 0, %s23
      %s27 = sphi 0, %s26
      %s43 = sphi 0, %s27
      %s47 = sphi 0, %s47
      %s49 = sphi 0, %s47
      %s50 = sphi 0, %s49
      %s64 = sphi 0, %s50
      %s68 = sphi 0, %s68
      %s70 = sphi 0, %s68
      %s71 = sphi 0, %s70
      %s85 = sphi 0, %s71
      %s89 = sphi 0, %s89
      %s91 = sphi 0, %s89
      %s92 = sphi 0, %s91
      %s106 = sphi 0, %s92
      %s112 = sphi 0, %s114
      %s115 = sphi 0, %s112
      %s116 = sphi 0, %s115
      %s132 = sphi 0, %s116
    $region4: #{enc_disc_block.1} parent=1 // loop_header_branch
      %16 = sbr.rel (%p14) target = $region8
    $region5: #{enc_disc_block.1} parent=1 // loop_body
      %s18 = ssub.s32 %s13, 1
      %s19 = ssub.s32 %s13, 2
      %s20 = sadd.s32 %s13, 1
      %s21 = ssub.s32 %s13, %s20
      %p22 = scmp.eq.s32.totalorder %s21, 0
      %s24 = sadd.s32 %s23, 1
      %s25 = scalar_select %p22, %s23, %s24
      %p28 = pneg %p22
      %p29 = scmp.eq.s32.totalorder %s13, 1
      %p30 = por %p28, %p29
      %p31 = scmp.ne.s32.totalorder %s23, %s26
      %p32 = scmp.eq.s32.totalorder %s13, 0
      %p33 = por %p31, %p32
      %p34 = scmp.ne.s32.totalorder %s23, %s26
      %p35 = scmp.eq.s32.totalorder %s18, 1
      %p36 = por %p34, %p35
      %p37 = scmp.ne.s32.totalorder %s26, %s27
      %p38 = scmp.eq.s32.totalorder %s18, 0
      %p39 = por %p37, %p38
      %p40 = scmp.ne.s32.totalorder %s26, %s27
      %p41 = scmp.eq.s32.totalorder %s19, 1
      %p42 = por %p40, %p41
      %p44 = scmp.ne.s32.totalorder %s27, %s43
      %p45 = scmp.eq.s32.totalorder %s19, 0
      %p46 = por %p44, %p45
      %s48 = sadd.s32 %s47, 1
      %p51 = scmp.eq.s32.totalorder %s13, 1
      %p52 = scmp.ne.s32.totalorder %s47, %s49
      %p53 = scmp.eq.s32.totalorder %s13, 0
      %p54 = por %p52, %p53
      %p55 = scmp.ne.s32.totalorder %s47, %s49
      %p56 = scmp.eq.s32.totalorder %s18, 1
      %p57 = por %p55, %p56
      %p58 = scmp.ne.s32.totalorder %s49, %s50
      %p59 = scmp.eq.s32.totalorder %s18, 0
      %p60 = por %p58, %p59
      %p61 = scmp.ne.s32.totalorder %s49, %s50
      %p62 = scmp.eq.s32.totalorder %s19, 1
      %p63 = por %p61, %p62
      %p65 = scmp.ne.s32.totalorder %s50, %s64
      %p66 = scmp.eq.s32.totalorder %s19, 0
      %p67 = por %p65, %p66
      %s69 = sadd.s32 %s68, 1
      %p72 = scmp.eq.s32.totalorder %s13, 1
      %p73 = scmp.ne.s32.totalorder %s68, %s70
      %p74 = scmp.eq.s32.totalorder %s13, 0
      %p75 = por %p73, %p74
      %p76 = scmp.ne.s32.totalorder %s68, %s70
      %p77 = scmp.eq.s32.totalorder %s18, 1
      %p78 = por %p76, %p77
      %p79 = scmp.ne.s32.totalorder %s70, %s71
      %p80 = scmp.eq.s32.totalorder %s18, 0
      %p81 = por %p79, %p80
      %p82 = scmp.ne.s32.totalorder %s70, %s71
      %p83 = scmp.eq.s32.totalorder %s19, 1
      %p84 = por %p82, %p83
      %p86 = scmp.ne.s32.totalorder %s71, %s85
      %p87 = scmp.eq.s32.totalorder %s19, 0
      %p88 = por %p86, %p87
      %s90 = sadd.s32 %s89, 1
      %p93 = scmp.eq.s32.totalorder %s13, 1
      %p94 = scmp.ne.s32.totalorder %s89, %s91
      %p95 = scmp.eq.s32.totalorder %s13, 0
      %p96 = por %p94, %p95
      %p97 = scmp.ne.s32.totalorder %s89, %s91
      %p98 = scmp.eq.s32.totalorder %s18, 1
      %p99 = por %p97, %p98
      %p100 = scmp.ne.s32.totalorder %s91, %s92
      %p101 = scmp.eq.s32.totalorder %s18, 0
      %p102 = por %p100, %p101
      %p103 = scmp.ne.s32.totalorder %s91, %s92
      %p104 = scmp.eq.s32.totalorder %s19, 1
      %p105 = por %p103, %p104
      %p107 = scmp.ne.s32.totalorder %s92, %s106
      %p108 = scmp.eq.s32.totalorder %s19, 0
      %p109 = por %p107, %p108
      %s110 = ssub.s32 %s13, %s20
      %p111 = scmp.eq.s32.totalorder %s110, 0
      %s113 = sadd.s32 %s112, 1
      %s114 = scalar_select %p111, %s112, %s113
      %p117 = pneg %p111
      %p118 = scmp.eq.s32.totalorder %s13, 1
      %p119 = por %p117, %p118
      %p120 = scmp.ne.s32.totalorder %s112, %s115
      %p121 = scmp.eq.s32.totalorder %s13, 0
      %p122 = por %p120, %p121
      %p123 = scmp.ne.s32.totalorder %s112, %s115
      %p124 = scmp.eq.s32.totalorder %s18, 1
      %p125 = por %p123, %p124
      %p126 = scmp.ne.s32.totalorder %s115, %s116
      %p127 = scmp.eq.s32.totalorder %s18, 0
      %p128 = por %p126, %p127
      %p129 = scmp.ne.s32.totalorder %s115, %s116
      %p130 = scmp.eq.s32.totalorder %s19, 1
      %p131 = por %p129, %p130
      %p133 = scmp.ne.s32.totalorder %s116, %s132
      %p134 = scmp.eq.s32.totalorder %s19, 0
      %p135 = por %p133, %p134
      %p136 = scmp.le.s32.totalorder 1, %s13
      %p137 = scmp.lt.s32.totalorder %s13, 3
      %p138 = pnand %p136, %p137
      %p139 = pneg %p138
      // Predicated region
      $region9: #{enc_disc_block.1} parent=5 // pred_check
        _
      $region10: #{enc_disc_block.1} parent=5 // pred_check_branch
        %141 = sbr.rel (%p138) target = $region12
      $region11: #{enc_disc_block.1} parent=5 // pred_region
        %s142 = ssub.s32 %s13, 1
        // Predicated region
        $region13: #{enc_disc_block.1} parent=11 // pred_check
          %p143 = pneg %p60
        $region14: #{enc_disc_block.1} parent=11 // pred_check_branch
          %145 = sbr.rel (%p143) target = $region16
        $region15: #{enc_disc_block.1} parent=11 // pred_region
          _
        $region16: #{enc_disc_block.1} parent=11 // pred_fallthru
          _
        // Predicated region
        $region17: #{enc_disc_block.1} parent=11 // pred_check
          %p146 = pneg %p81
        $region18: #{enc_disc_block.1} parent=11 // pred_check_branch
          %148 = sbr.rel (%p146) target = $region20
        $region19: #{enc_disc_block.1} parent=11 // pred_region
          _
        $region20: #{enc_disc_block.1} parent=11 // pred_fallthru
          _
        // Predicated region
        $region21: #{enc_disc_block.1} parent=11 // pred_check
          %p149 = pneg %p102
        $region22: #{enc_disc_block.1} parent=11 // pred_check_branch
          %151 = sbr.rel (%p149) target = $region24
        $region23: #{enc_disc_block.1} parent=11 // pred_region
          _
        $region24: #{enc_disc_block.1} parent=11 // pred_fallthru
          _
      $region12: #{enc_disc_block.1} parent=5 // pred_fallthru
        _
      %p152 = scmp.lt.s32.totalorder %s13, 2
      // Predicated region
      $region25: #{enc_disc_block.1} parent=5 // pred_check
        %p153 = pneg %p152
      $region26: #{enc_disc_block.1} parent=5 // pred_check_branch
        %155 = sbr.rel (%p153) target = $region28
      $region27: #{enc_disc_block.1} parent=5 // pred_region
        // Predicated region
        $region29: #{enc_disc_block.1} parent=27 // pred_check
          %p156 = pneg %p33
        $region30: #{enc_disc_block.1} parent=27 // pred_check_branch
          %158 = sbr.rel (%p156) target = $region32
        $region31: #{enc_disc_block.1} parent=27 // pred_region
          %p159 = scmp.lt.s32.totalorder %s13, 1
          %s160 = scalar_select %p159, %s13, 1
          %s161 = smul.addr %s160, 16
          %s162 = smul.addr %s161, 8
          %s163 = scalar_lea.vmem %s0, %s162
        $region32: #{enc_disc_block.1} parent=27 // pred_fallthru
          _
      $region28: #{enc_disc_block.1} parent=5 // pred_fallthru
        _
      %p164 = scmp.le.s32.totalorder 1, %s13
      %p165 = scmp.lt.s32.totalorder %s13, 3
      %p166 = pnand %p164, %p165
      %p167 = pneg %p166
      // Predicated region
      $region33: #{enc_disc_block.1} parent=5 // pred_check
        _
      $region34: #{enc_disc_block.1} parent=5 // pred_check_branch
        %169 = sbr.rel (%p166) target = $region36
      $region35: #{enc_disc_block.1} parent=5 // pred_region
        %s170 = ssub.s32 %s13, 1
        %p171 = scmp.lt.s32.totalorder %s18, 1
        %s172 = scalar_select %p171, %s18, 1
        %s173 = smul.addr %s172, 16
        %s174 = smul.addr %s173, 8
        %s175 = scalar_lea.vmem %s0, %s174
        %p176 = pneg %p39
        %p177 = pneg %p36
        %p178 = pneg %p60
        %p179 = pneg %p57
        %p180 = pneg %p81
        %p181 = pneg %p78
        %p182 = pneg %p102
        %p183 = pneg %p99
        %p184 = pneg %p128
        %p185 = pneg %p125
        %s186 = sand.u32 %s115, 1
        %s187 = scalar_lea.sflag [#allocation4], %s186
        %s188 = sand.u32 %s115, 1
        %s189 = smul.addr %s188, 64
        %s190 = scalar_lea.vmem [#allocation3], %s189
        %p191 = scmp.lt.s32.totalorder %s18, 1
        %s192 = scalar_select %p191, %s18, 1
        %s193 = smul.addr %s192, 16
        %s194 = smul.addr %s193, 8
        %s195 = scalar_lea.vmem %s0, %s194
        %vm197 = vcmask 261120
        %198 = vst.msk [vmem:[#allocation2] sm:$0xff] %vm197, 0.0
        %vm199 = vcmask 254976
        %200 = vst.msk [vmem:[#allocation2 + $0x8] sm:$0x3] %vm199, 0.0
        %201 = vst.msk [vmem:[#allocation2 + $0x10] sm:$0xff] %vm197, 0.0
        %202 = vst.msk [vmem:[#allocation2 + $0x18] sm:$0x3] %vm199, 0.0
        %203 = vst.msk [vmem:[#allocation2 + $0x20] sm:$0xff] %vm197, 0.0
        %204 = vst.msk [vmem:[#allocation2 + $0x28] sm:$0x3] %vm199, 0.0
        %205 = vst.msk [vmem:[#allocation2 + $0x30] sm:$0xff] %vm197, 0.0
        %206 = vst.msk [vmem:[#allocation2 + $0x38] sm:$0x3] %vm199, 0.0
        %207 = vst.msk [vmem:[#allocation2 + $0x40] sm:$0xff] %vm197, 0.0
        %208 = vst.msk [vmem:[#allocation2 + $0x48] sm:$0x3] %vm199, 0.0
        %209 = vst.msk [vmem:[#allocation2 + $0x50] sm:$0xff] %vm197, 0.0
        %210 = vst.msk [vmem:[#allocation2 + $0x58] sm:$0x3] %vm199, 0.0
        %211 = vst.msk [vmem:[#allocation2 + $0x60] sm:$0xff] %vm197, 0.0
        %212 = vst.msk [vmem:[#allocation2 + $0x68] sm:$0x3] %vm199, 0.0
        %213 = vst.msk [vmem:[#allocation2 + $0x70] sm:$0xff] %vm197, 0.0
        %214 = vst.msk [vmem:[#allocation2 + $0x78] sm:$0x3] %vm199, 0.0
        %215 = vst.msk [vmem:[#allocation2 + $0x80] sm:$0xff] %vm197, 0.0
        %216 = vst.msk [vmem:[#allocation2 + $0x88] sm:$0x3] %vm199, 0.0
        %217 = vst.msk [vmem:[#allocation2 + $0x90] sm:$0xff] %vm197, 0.0
        %218 = vst.msk [vmem:[#allocation2 + $0x98] sm:$0x3] %vm199, 0.0
        %v219 = vld [vmem:[%s195] sm:$0xff]
        %v220 = vld [vmem:[%s195 + $0x10] sm:$0xff]
        %v221 = vld [vmem:[%s195 + $0x20] sm:$0xff]
        %v222 = vld [vmem:[%s195 + $0x30] sm:$0xff]
        %v223 = vld [vmem:[%s195 + $0x40] sm:$0xff]
        %v224 = vld [vmem:[%s195 + $0x50] sm:$0xff]
        %v225 = vld [vmem:[%s195 + $0x60] sm:$0xff]
        %v226 = vld [vmem:[%s195 + $0x70] sm:$0xff]
        %s227 = scalar_lea.vmem %s195, 8
        %v228 = vld [vmem:[%s227] sm:$0xff]
        %v229 = vld [vmem:[%s227 + $0x10] sm:$0xff]
        %v230 = vld [vmem:[%s227 + $0x20] sm:$0xff]
        %v231 = vld [vmem:[%s227 + $0x30] sm:$0xff]
        %v232 = vld [vmem:[%s227 + $0x40] sm:$0xff]
        %v233 = vld [vmem:[%s227 + $0x50] sm:$0xff]
        %v234 = vld [vmem:[%s227 + $0x60] sm:$0xff]
        %v235 = vld [vmem:[%s227 + $0x70] sm:$0xff]
        %v236 = vmax.f32 %v219, %v228
        %v237 = vmax.f32 %v220, %v229
        %v238 = vmax.f32 %v221, %v230
        %v239 = vmax.f32 %v222, %v231
        %v240 = vmax.f32 %v223, %v232
        %v241 = vmax.f32 %v224, %v233
        %v242 = vmax.f32 %v225, %v234
        %v243 = vmax.f32 %v226, %v235
        %252 = vrot.lane.b32.xlu0 %v236, 112
        %v253 = vpop.permute.xlu0 %252
        %254 = vrot.lane.b32.xlu0 %v237, 112
        %v255 = vpop.permute.xlu0 %254
        %256 = vrot.lane.b32.xlu0 %v238, 112
        %v257 = vpop.permute.xlu0 %256
        %258 = vrot.lane.b32.xlu0 %v239, 112
        %v259 = vpop.permute.xlu0 %258
        %260 = vrot.lane.b32.xlu0 %v240, 112
        %v261 = vpop.permute.xlu0 %260
        %262 = vrot.lane.b32.xlu0 %v241, 112
        %v263 = vpop.permute.xlu0 %262
        %264 = vrot.lane.b32.xlu0 %v242, 112
        %v265 = vpop.permute.xlu0 %264
        %266 = vrot.lane.b32.xlu0 %v243, 112
        %v267 = vpop.permute.xlu0 %266
        %v276 = vmax.f32 %v236, %v253
        %v277 = vmax.f32 %v237, %v255
        %v278 = vmax.f32 %v238, %v257
        %v279 = vmax.f32 %v239, %v259
        %v280 = vmax.f32 %v240, %v261
        %v281 = vmax.f32 %v241, %v263
        %v282 = vmax.f32 %v242, %v265
        %v283 = vmax.f32 %v243, %v267
        %v284 = vpack.c.bf16 %v277, %v276
        %v285 = vpack.c.bf16 %v279, %v278
        %v286 = vpack.c.bf16 %v281, %v280
        %v287 = vpack.c.bf16 %v283, %v282
        %v288 = vld [vmem:[%s1] sm:$0xf]
        %v289 = vld [vmem:[%s1 + $0x4] sm:$0xf]
        %v290 = vld [vmem:[%s3] sm:$0x1]
        %v291 = vlaneseq
        %v292 = vshrl.u32 %v291, 7
        %v293 = vsub.s32 0, %v292
        %v294 = vrot.slane %v290, %v293
        %v297 = vunpack.c.l.b16 %v288
        %v298 = vunpack.c.l.b16 %v289
        %v299 = vpack.c.b16 %v298, %v297
        %vm301 = vcmask 130048
        %v303 = vsel %vm301, %v284, 0
        %v306 = vsel %vm301, %v285, 0
        %v309 = vsel %vm301, %v286, 0
        %v312 = vsel %vm301, %v287, 0
        %314 = vmatprep.subr.bf16.mxu0 0
        %315 = vmatpush1.bf16.msra.mxu0 0
        %316 = vmatprep.subr.bf16.mxu0 0
        %317 = vmatpush1.bf16.msra.mxu0 0
        %318 = vmatprep.subr.bf16.mxu0 0
        %319 = vmatpush1.bf16.msra.mxu0 0
        %320 = vmatprep.subr.bf16.mxu0 0
        %321 = vmatpush1.bf16.msra.mxu0 0
        %322 = vmatprep.subr.bf16.mxu0 0
        %323 = vmatpush1.bf16.msra.mxu0 0
        %324 = vmatprep.subr.bf16.mxu0 0
        %325 = vmatpush1.bf16.msra.mxu0 0
        %326 = vmatprep.subr.bf16.mxu0 0
        %327 = vmatpush1.bf16.msra.mxu0 0
        %328 = vmatprep.subr.bf16.mxu0 0
        %329 = vmatpush1.bf16.msra.mxu0 %v299
        %330 = vmatprep.subr.bf16.mxu0 0
        %331 = vmatpush2.bf16.msra.mxu0 0
        %332 = vmatprep.subr.bf16.mxu0 0
        %333 = vmatpush2.bf16.msra.mxu0 0
        %334 = vmatprep.subr.bf16.mxu0 0
        %335 = vmatpush2.bf16.msra.mxu0 0
        %336 = vmatprep.subr.bf16.mxu0 0
        %337 = vmatpush2.bf16.msra.mxu0 0
        %338 = vmatprep.subr.bf16.mxu0 0
        %339 = vmatpush2.bf16.msra.mxu0 0
        %340 = vmatprep.subr.bf16.mxu0 0
        %341 = vmatpush2.bf16.msra.mxu0 0
        %342 = vmatprep.subr.bf16.mxu0 0
        %343 = vmatpush2.bf16.msra.mxu0 0
        %344 = vmatprep.subr.bf16.mxu0 0
        %345 = vmatpush2.bf16.msra.mxu0 0
        %346 = vmatprep.mubr.bf16.mxu0 0
        %347 = vmatmul.mubr.bf16.gmra.mxu0 %v303
        %v348 = vpop.f32.mrf.mxu0
        %v349 = vadd.f32 %v294, %v348
        %v350 = vpop.f32.mrf.mxu0
        %v351 = vpop.f32.mrf.mxu0
        %v352 = vadd.f32 %v294, %v351
        %v353 = vpop.f32.mrf.mxu0
        %354 = vmatprep.mubr.bf16.mxu0 0
        %355 = vmatmul.mubr.bf16.gmra.mxu0 %v306
        %v356 = vpop.f32.mrf.mxu0
        %v357 = vadd.f32 %v294, %v356
        %v358 = vpop.f32.mrf.mxu0
        %v359 = vpop.f32.mrf.mxu0
        %v360 = vadd.f32 %v294, %v359
        %v361 = vpop.f32.mrf.mxu0
        %362 = vmatprep.mubr.bf16.mxu0 0
        %363 = vmatmul.mubr.bf16.gmra.mxu0 %v309
        %v364 = vpop.f32.mrf.mxu0
        %v365 = vadd.f32 %v294, %v364
        %v366 = vpop.f32.mrf.mxu0
        %v367 = vpop.f32.mrf.mxu0
        %v368 = vadd.f32 %v294, %v367
        %v369 = vpop.f32.mrf.mxu0
        %370 = vmatprep.mubr.bf16.mxu0 0
        %371 = vmatmul.mubr.bf16.gmra.mxu0 %v312
        %v372 = vpop.f32.mrf.mxu0
        %v373 = vadd.f32 %v294, %v372
        %v374 = vpop.f32.mrf.mxu0
        %v375 = vpop.f32.mrf.mxu0
        %v376 = vadd.f32 %v294, %v375
        %v377 = vpop.f32.mrf.mxu0
        %378 = vdwg.mxu0
        %v379 = vld [vmem:[%s3 + $0x1] sm:$0x1]
        %v380 = vld [vmem:[%s3 + $0x2] sm:$0x1]
        %v381 = vld [vmem:[%s3 + $0x3] sm:$0x1]
        %v382 = vlaneseq
        %v383 = vshrl.u32 %v382, 7
        %v384 = vsub.s32 0, %v383
        %v385 = vrot.slane %v379, %v384
        %v386 = vmul.f32 %v349, %v385
        %v387 = vmul.f32 %v352, %v385
        %v388 = vmul.f32 %v357, %v385
        %v389 = vmul.f32 %v360, %v385
        %v390 = vmul.f32 %v365, %v385
        %v391 = vmul.f32 %v368, %v385
        %v392 = vmul.f32 %v373, %v385
        %v393 = vmul.f32 %v376, %v385
        %v394 = vlaneseq
        %v395 = vshrl.u32 %v394, 7
        %v396 = vsub.s32 0, %v395
        %v397 = vrot.slane %v380, %v396
        %v398 = vadd.f32 %v386, %v397
        %v399 = vadd.f32 %v387, %v397
        %v400 = vadd.f32 %v388, %v397
        %v401 = vadd.f32 %v389, %v397
        %v402 = vadd.f32 %v390, %v397
        %v403 = vadd.f32 %v391, %v397
        %v404 = vadd.f32 %v392, %v397
        %v405 = vadd.f32 %v393, %v397
        %s406 = scalar_lea.vmem [#allocation2], 16
        %407 = vst.msk [vmem:[%s406 + $0x1] sm:$0xff] %vm197, %v398
        %408 = vst.msk [vmem:[%s406 + $0x11] sm:$0xff] %vm197, %v399
        %409 = vst.msk [vmem:[%s406 + $0x21] sm:$0xff] %vm197, %v400
        %410 = vst.msk [vmem:[%s406 + $0x31] sm:$0xff] %vm197, %v401
        %411 = vst.msk [vmem:[%s406 + $0x41] sm:$0xff] %vm197, %v402
        %412 = vst.msk [vmem:[%s406 + $0x51] sm:$0xff] %vm197, %v403
        %413 = vst.msk [vmem:[%s406 + $0x61] sm:$0xff] %vm197, %v404
        %414 = vst.msk [vmem:[%s406 + $0x71] sm:$0xff] %vm197, %v405
        %v415 = vld [vmem:[#allocation2] sm:$0xff]
        %v416 = vld [vmem:[#allocation2 + $0x10] sm:$0xff]
        %v417 = vld [vmem:[#allocation2 + $0x20] sm:$0xff]
        %v418 = vld [vmem:[#allocation2 + $0x30] sm:$0xff]
        %v419 = vld [vmem:[#allocation2 + $0x40] sm:$0xff]
        %v420 = vld [vmem:[#allocation2 + $0x50] sm:$0xff]
        %v421 = vld [vmem:[#allocation2 + $0x60] sm:$0xff]
        %v422 = vld [vmem:[#allocation2 + $0x70] sm:$0xff]
        %v423 = vld [vmem:[#allocation2 + $0x1] sm:$0xff]
        %v424 = vld [vmem:[#allocation2 + $0x11] sm:$0xff]
        %v425 = vld [vmem:[#allocation2 + $0x21] sm:$0xff]
        %v426 = vld [vmem:[#allocation2 + $0x31] sm:$0xff]
        %v427 = vld [vmem:[#allocation2 + $0x41] sm:$0xff]
        %v428 = vld [vmem:[#allocation2 + $0x51] sm:$0xff]
        %v429 = vld [vmem:[#allocation2 + $0x61] sm:$0xff]
        %v430 = vld [vmem:[#allocation2 + $0x71] sm:$0xff]
        %v431 = vld [vmem:[#allocation2 + $0x2] sm:$0xff]
        %v432 = vld [vmem:[#allocation2 + $0x12] sm:$0xff]
        %v433 = vld [vmem:[#allocation2 + $0x22] sm:$0xff]
        %v434 = vld [vmem:[#allocation2 + $0x32] sm:$0xff]
        %v435 = vld [vmem:[#allocation2 + $0x42] sm:$0xff]
        %v436 = vld [vmem:[#allocation2 + $0x52] sm:$0xff]
        %v437 = vld [vmem:[#allocation2 + $0x62] sm:$0xff]
        %v438 = vld [vmem:[#allocation2 + $0x72] sm:$0xff]
        %v439 = vld [vmem:[%s406] sm:$0xff]
        %v440 = vld [vmem:[%s406 + $0x10] sm:$0xff]
        %v441 = vld [vmem:[%s406 + $0x20] sm:$0xff]
        %v442 = vld [vmem:[%s406 + $0x30] sm:$0xff]
        %v443 = vld [vmem:[%s406 + $0x40] sm:$0xff]
        %v444 = vld [vmem:[%s406 + $0x50] sm:$0xff]
        %v445 = vld [vmem:[%s406 + $0x60] sm:$0xff]
        %v446 = vld [vmem:[%s406 + $0x70] sm:$0xff]
        %v447 = vld [vmem:[%s406 + $0x1] sm:$0xff]
        %v448 = vld [vmem:[%s406 + $0x11] sm:$0xff]
        %v449 = vld [vmem:[%s406 + $0x21] sm:$0xff]
        %v450 = vld [vmem:[%s406 + $0x31] sm:$0xff]
        %v451 = vld [vmem:[%s406 + $0x41] sm:$0xff]
        %v452 = vld [vmem:[%s406 + $0x51] sm:$0xff]
        %v453 = vld [vmem:[%s406 + $0x61] sm:$0xff]
        %v454 = vld [vmem:[%s406 + $0x71] sm:$0xff]
        %v455 = vld [vmem:[%s406 + $0x2] sm:$0xff]
        %v456 = vld [vmem:[%s406 + $0x12] sm:$0xff]
        %v457 = vld [vmem:[%s406 + $0x22] sm:$0xff]
        %v458 = vld [vmem:[%s406 + $0x32] sm:$0xff]
        %v459 = vld [vmem:[%s406 + $0x42] sm:$0xff]
        %v460 = vld [vmem:[%s406 + $0x52] sm:$0xff]
        %v461 = vld [vmem:[%s406 + $0x62] sm:$0xff]
        %v462 = vld [vmem:[%s406 + $0x72] sm:$0xff]
        %s463 = scalar_lea.vmem [#allocation2], 32
        %v464 = vld [vmem:[%s463] sm:$0xff]
        %v465 = vld [vmem:[%s463 + $0x10] sm:$0xff]
        %v466 = vld [vmem:[%s463 + $0x20] sm:$0xff]
        %v467 = vld [vmem:[%s463 + $0x30] sm:$0xff]
        %v468 = vld [vmem:[%s463 + $0x40] sm:$0xff]
        %v469 = vld [vmem:[%s463 + $0x50] sm:$0xff]
        %v470 = vld [vmem:[%s463 + $0x60] sm:$0xff]
        %v471 = vld [vmem:[%s463 + $0x70] sm:$0xff]
        %v472 = vld [vmem:[%s463 + $0x1] sm:$0xff]
        %v473 = vld [vmem:[%s463 + $0x11] sm:$0xff]
        %v474 = vld [vmem:[%s463 + $0x21] sm:$0xff]
        %v475 = vld [vmem:[%s463 + $0x31] sm:$0xff]
        %v476 = vld [vmem:[%s463 + $0x41] sm:$0xff]
        %v477 = vld [vmem:[%s463 + $0x51] sm:$0xff]
        %v478 = vld [vmem:[%s463 + $0x61] sm:$0xff]
        %v479 = vld [vmem:[%s463 + $0x71] sm:$0xff]
        %v480 = vld [vmem:[%s463 + $0x2] sm:$0xff]
        %v481 = vld [vmem:[%s463 + $0x12] sm:$0xff]
        %v482 = vld [vmem:[%s463 + $0x22] sm:$0xff]
        %v483 = vld [vmem:[%s463 + $0x32] sm:$0xff]
        %v484 = vld [vmem:[%s463 + $0x42] sm:$0xff]
        %v485 = vld [vmem:[%s463 + $0x52] sm:$0xff]
        %v486 = vld [vmem:[%s463 + $0x62] sm:$0xff]
        %v487 = vld [vmem:[%s463 + $0x72] sm:$0xff]
        %496 = vrot.lane.b32.xlu0 %v423, 32
        %v497 = vpop.permute.xlu0 %496
        %498 = vrot.lane.b32.xlu0 %v424, 32
        %v499 = vpop.permute.xlu0 %498
        %500 = vrot.lane.b32.xlu0 %v425, 32
        %v501 = vpop.permute.xlu0 %500
        %502 = vrot.lane.b32.xlu0 %v426, 32
        %v503 = vpop.permute.xlu0 %502
        %504 = vrot.lane.b32.xlu0 %v427, 32
        %v505 = vpop.permute.xlu0 %504
        %506 = vrot.lane.b32.xlu0 %v428, 32
        %v507 = vpop.permute.xlu0 %506
        %508 = vrot.lane.b32.xlu0 %v429, 32
        %v509 = vpop.permute.xlu0 %508
        %510 = vrot.lane.b32.xlu0 %v430, 32
        %v511 = vpop.permute.xlu0 %510
        %528 = vrot.lane.b32.xlu0 %v431, 64
        %v529 = vpop.permute.xlu0 %528
        %530 = vrot.lane.b32.xlu0 %v432, 64
        %v531 = vpop.permute.xlu0 %530
        %532 = vrot.lane.b32.xlu0 %v433, 64
        %v533 = vpop.permute.xlu0 %532
        %534 = vrot.lane.b32.xlu0 %v434, 64
        %v535 = vpop.permute.xlu0 %534
        %536 = vrot.lane.b32.xlu0 %v435, 64
        %v537 = vpop.permute.xlu0 %536
        %538 = vrot.lane.b32.xlu0 %v436, 64
        %v539 = vpop.permute.xlu0 %538
        %540 = vrot.lane.b32.xlu0 %v437, 64
        %v541 = vpop.permute.xlu0 %540
        %542 = vrot.lane.b32.xlu0 %v438, 64
        %v543 = vpop.permute.xlu0 %542
        %560 = vrot.lane.b32.xlu0 %v439, 96
        %v561 = vpop.permute.xlu0 %560
        %562 = vrot.lane.b32.xlu0 %v440, 96
        %v563 = vpop.permute.xlu0 %562
        %564 = vrot.lane.b32.xlu0 %v441, 96
        %v565 = vpop.permute.xlu0 %564
        %566 = vrot.lane.b32.xlu0 %v442, 96
        %v567 = vpop.permute.xlu0 %566
        %568 = vrot.lane.b32.xlu0 %v443, 96
        %v569 = vpop.permute.xlu0 %568
        %570 = vrot.lane.b32.xlu0 %v444, 96
        %v571 = vpop.permute.xlu0 %570
        %572 = vrot.lane.b32.xlu0 %v445, 96
        %v573 = vpop.permute.xlu0 %572
        %574 = vrot.lane.b32.xlu0 %v446, 96
        %v575 = vpop.permute.xlu0 %574
        %592 = vrot.lane.b32.xlu0 %v455, 32
        %v593 = vpop.permute.xlu0 %592
        %594 = vrot.lane.b32.xlu0 %v456, 32
        %v595 = vpop.permute.xlu0 %594
        %596 = vrot.lane.b32.xlu0 %v457, 32
        %v597 = vpop.permute.xlu0 %596
        %598 = vrot.lane.b32.xlu0 %v458, 32
        %v599 = vpop.permute.xlu0 %598
        %600 = vrot.lane.b32.xlu0 %v459, 32
        %v601 = vpop.permute.xlu0 %600
        %602 = vrot.lane.b32.xlu0 %v460, 32
        %v603 = vpop.permute.xlu0 %602
        %604 = vrot.lane.b32.xlu0 %v461, 32
        %v605 = vpop.permute.xlu0 %604
        %606 = vrot.lane.b32.xlu0 %v462, 32
        %v607 = vpop.permute.xlu0 %606
        %624 = vrot.lane.b32.xlu0 %v464, 64
        %v625 = vpop.permute.xlu0 %624
        %626 = vrot.lane.b32.xlu0 %v465, 64
        %v627 = vpop.permute.xlu0 %626
        %628 = vrot.lane.b32.xlu0 %v466, 64
        %v629 = vpop.permute.xlu0 %628
        %630 = vrot.lane.b32.xlu0 %v467, 64
        %v631 = vpop.permute.xlu0 %630
        %632 = vrot.lane.b32.xlu0 %v468, 64
        %v633 = vpop.permute.xlu0 %632
        %634 = vrot.lane.b32.xlu0 %v469, 64
        %v635 = vpop.permute.xlu0 %634
        %636 = vrot.lane.b32.xlu0 %v470, 64
        %v637 = vpop.permute.xlu0 %636
        %638 = vrot.lane.b32.xlu0 %v471, 64
        %v639 = vpop.permute.xlu0 %638
        %656 = vrot.lane.b32.xlu0 %v472, 96
        %v657 = vpop.permute.xlu0 %656
        %658 = vrot.lane.b32.xlu0 %v473, 96
        %v659 = vpop.permute.xlu0 %658
        %660 = vrot.lane.b32.xlu0 %v474, 96
        %v661 = vpop.permute.xlu0 %660
        %662 = vrot.lane.b32.xlu0 %v475, 96
        %v663 = vpop.permute.xlu0 %662
        %664 = vrot.lane.b32.xlu0 %v476, 96
        %v665 = vpop.permute.xlu0 %664
        %666 = vrot.lane.b32.xlu0 %v477, 96
        %v667 = vpop.permute.xlu0 %666
        %668 = vrot.lane.b32.xlu0 %v478, 96
        %v669 = vpop.permute.xlu0 %668
        %670 = vrot.lane.b32.xlu0 %v479, 96
        %v671 = vpop.permute.xlu0 %670
        %v680 = vsel %vm197, %v415, %v497
        %v681 = vsel %vm197, %v416, %v499
        %v682 = vsel %vm197, %v417, %v501
        %v683 = vsel %vm197, %v418, %v503
        %v684 = vsel %vm197, %v419, %v505
        %v685 = vsel %vm197, %v420, %v507
        %v686 = vsel %vm197, %v421, %v509
        %v687 = vsel %vm197, %v422, %v511
        %vm688 = vcmask 523264
        %v689 = vsel %vm688, %v680, %v529
        %v690 = vsel %vm688, %v681, %v531
        %v691 = vsel %vm688, %v682, %v533
        %v692 = vsel %vm688, %v683, %v535
        %v693 = vsel %vm688, %v684, %v537
        %v694 = vsel %vm688, %v685, %v539
        %v695 = vsel %vm688, %v686, %v541
        %v696 = vsel %vm688, %v687, %v543
        %vm697 = vcmask 785408
        %v698 = vsel %vm697, %v689, %v561
        %v699 = vsel %vm697, %v690, %v563
        %v700 = vsel %vm697, %v691, %v565
        %v701 = vsel %vm697, %v692, %v567
        %v702 = vsel %vm697, %v693, %v569
        %v703 = vsel %vm697, %v694, %v571
        %v704 = vsel %vm697, %v695, %v573
        %v705 = vsel %vm697, %v696, %v575
        %v706 = vsel %vm197, %v447, %v593
        %v707 = vsel %vm197, %v448, %v595
        %v708 = vsel %vm197, %v449, %v597
        %v709 = vsel %vm197, %v450, %v599
        %v710 = vsel %vm197, %v451, %v601
        %v711 = vsel %vm197, %v452, %v603
        %v712 = vsel %vm197, %v453, %v605
        %v713 = vsel %vm197, %v454, %v607
        %v714 = vsel %vm688, %v706, %v625
        %v715 = vsel %vm688, %v707, %v627
        %v716 = vsel %vm688, %v708, %v629
        %v717 = vsel %vm688, %v709, %v631
        %v718 = vsel %vm688, %v710, %v633
        %v719 = vsel %vm688, %v711, %v635
        %v720 = vsel %vm688, %v712, %v637
        %v721 = vsel %vm688, %v713, %v639
        %v722 = vsel %vm697, %v714, %v657
        %v723 = vsel %vm697, %v715, %v659
        %v724 = vsel %vm697, %v716, %v661
        %v725 = vsel %vm697, %v717, %v663
        %v726 = vsel %vm697, %v718, %v665
        %v727 = vsel %vm697, %v719, %v667
        %v728 = vsel %vm697, %v720, %v669
        %v729 = vsel %vm697, %v721, %v671
        %v730 = vpack.c.bf16 %v699, %v698
        %v731 = vpack.c.bf16 %v723, %v722
        %v732 = vpack.c.bf16 %v481, %v480
        %v733 = vpack.c.bf16 %v701, %v700
        %v734 = vpack.c.bf16 %v725, %v724
        %v735 = vpack.c.bf16 %v483, %v482
        %v736 = vpack.c.bf16 %v703, %v702
        %v737 = vpack.c.bf16 %v727, %v726
        %v738 = vpack.c.bf16 %v485, %v484
        %v739 = vpack.c.bf16 %v705, %v704
        %v740 = vpack.c.bf16 %v729, %v728
        %v741 = vpack.c.bf16 %v487, %v486
        %v742 = vld [vmem:[%s2] sm:$0xf]
        %v743 = vld [vmem:[%s2 + $0x4] sm:$0xf]
        %v744 = vld [vmem:[%s2 + $0x8] sm:$0xf]
        %v745 = vld [vmem:[%s2 + $0xc] sm:$0xf]
        %v746 = vld [vmem:[%s2 + $0x10] sm:$0xf]
        %v747 = vld [vmem:[%s2 + $0x14] sm:$0xf]
        %v748 = vld [vmem:[%s2 + $0x18] sm:$0xf]
        %v749 = vld [vmem:[%s2 + $0x1c] sm:$0xf]
        %v750 = vld [vmem:[%s2 + $0x20] sm:$0xf]
        %v751 = vld [vmem:[%s2 + $0x24] sm:$0xf]
        %v752 = vld [vmem:[%s2 + $0x28] sm:$0xf]
        %v753 = vld [vmem:[%s2 + $0x2c] sm:$0xf]
        %v754 = vld [vmem:[%s2 + $0x30] sm:$0xf]
        %v755 = vld [vmem:[%s2 + $0x34] sm:$0xf]
        %v756 = vld [vmem:[%s2 + $0x38] sm:$0xf]
        %v757 = vld [vmem:[%s2 + $0x3c] sm:$0xf]
        %v758 = vld [vmem:[%s2 + $0x40] sm:$0xf]
        %v759 = vld [vmem:[%s2 + $0x44] sm:$0xf]
        %v760 = vld [vmem:[%s2 + $0x48] sm:$0xf]
        %v761 = vld [vmem:[%s2 + $0x4c] sm:$0xf]
        %v762 = vld [vmem:[%s2 + $0x50] sm:$0xf]
        %v763 = vld [vmem:[%s2 + $0x54] sm:$0xf]
        %v764 = vld [vmem:[%s2 + $0x58] sm:$0xf]
        %v765 = vld [vmem:[%s2 + $0x5c] sm:$0xf]
        %v766 = vld [vmem:[%s2 + $0x60] sm:$0xf]
        %v767 = vld [vmem:[%s2 + $0x64] sm:$0xf]
        %v768 = vld [vmem:[%s2 + $0x68] sm:$0xf]
        %v769 = vld [vmem:[%s2 + $0x6c] sm:$0xf]
        %v770 = vld [vmem:[%s2 + $0x70] sm:$0xf]
        %v771 = vld [vmem:[%s2 + $0x74] sm:$0xf]
        %v772 = vld [vmem:[%s2 + $0x78] sm:$0xf]
        %v773 = vld [vmem:[%s2 + $0x7c] sm:$0xf]
        %v774 = vld [vmem:[%s2 + $0x80] sm:$0xf]
        %v775 = vld [vmem:[%s2 + $0x84] sm:$0xf]
        %v776 = vld [vmem:[%s2 + $0x88] sm:$0xf]
        %v777 = vld [vmem:[%s2 + $0x8c] sm:$0xf]
        %v778 = vlaneseq
        %v779 = vshrl.u32 %v778, 7
        %v780 = vsub.s32 0, %v779
        %v781 = vrot.slane %v381, %v780
        %v818 = vunpack.c.l.b16 %v742
        %v819 = vunpack.c.l.b16 %v743
        %v820 = vunpack.c.l.b16 %v744
        %v821 = vunpack.c.l.b16 %v745
        %v822 = vunpack.c.l.b16 %v746
        %v823 = vunpack.c.l.b16 %v747
        %v824 = vunpack.c.l.b16 %v748
        %v825 = vunpack.c.l.b16 %v749
        %v826 = vunpack.c.l.b16 %v750
        %v827 = vunpack.c.l.b16 %v751
        %v828 = vunpack.c.l.b16 %v752
        %v829 = vunpack.c.l.b16 %v753
        %v830 = vunpack.c.l.b16 %v754
        %v831 = vunpack.c.l.b16 %v755
        %v832 = vunpack.c.l.b16 %v756
        %v833 = vunpack.c.l.b16 %v757
        %v834 = vunpack.c.l.b16 %v758
        %v835 = vunpack.c.l.b16 %v759
        %v836 = vunpack.c.l.b16 %v760
        %v837 = vunpack.c.l.b16 %v761
        %v838 = vunpack.c.l.b16 %v762
        %v839 = vunpack.c.l.b16 %v763
        %v840 = vunpack.c.l.b16 %v764
        %v841 = vunpack.c.l.b16 %v765
        %v842 = vunpack.c.l.b16 %v766
        %v843 = vunpack.c.l.b16 %v767
        %v844 = vunpack.c.l.b16 %v768
        %v845 = vunpack.c.l.b16 %v769
        %v846 = vunpack.c.l.b16 %v770
        %v847 = vunpack.c.l.b16 %v771
        %v848 = vunpack.c.l.b16 %v772
        %v849 = vunpack.c.l.b16 %v773
        %v850 = vunpack.c.l.b16 %v774
        %v851 = vunpack.c.l.b16 %v775
        %v852 = vunpack.c.l.b16 %v776
        %v853 = vunpack.c.l.b16 %v777
        %v854 = vpack.c.b16 %v819, %v818
        %v855 = vpack.c.b16 %v821, %v820
        %v856 = vpack.c.b16 %v823, %v822
        %v857 = vpack.c.b16 %v825, %v824
        %v858 = vpack.c.b16 %v827, %v826
        %v859 = vpack.c.b16 %v829, %v828
        %v860 = vpack.c.b16 %v831, %v830
        %v861 = vpack.c.b16 %v833, %v832
        %v862 = vpack.c.b16 %v835, %v834
        %v863 = vpack.c.b16 %v837, %v836
        %v864 = vpack.c.b16 %v839, %v838
        %v865 = vpack.c.b16 %v841, %v840
        %v866 = vpack.c.b16 %v843, %v842
        %v867 = vpack.c.b16 %v845, %v844
        %v868 = vpack.c.b16 %v847, %v846
        %v869 = vpack.c.b16 %v849, %v848
        %v870 = vpack.c.b16 %v851, %v850
        %v871 = vpack.c.b16 %v853, %v852
        %v891 = vsel %vm197, %v732, 0
        %v894 = vsel %vm197, %v735, 0
        %v897 = vsel %vm197, %v738, 0
        %v900 = vsel %vm197, %v741, 0
        %902 = vmatprep.subr.bf16.mxu0 0
        %903 = vmatpush1.bf16.msra.mxu0 %v861
        %904 = vmatprep.subr.bf16.mxu0 0
        %905 = vmatpush1.bf16.msra.mxu0 %v860
        %906 = vmatprep.subr.bf16.mxu0 0
        %907 = vmatpush1.bf16.msra.mxu0 %v859
        %908 = vmatprep.subr.bf16.mxu0 0
        %909 = vmatpush1.bf16.msra.mxu0 %v858
        %910 = vmatprep.subr.bf16.mxu0 0
        %911 = vmatpush1.bf16.msra.mxu0 %v857
        %912 = vmatprep.subr.bf16.mxu0 0
        %913 = vmatpush1.bf16.msra.mxu0 %v856
        %914 = vmatprep.subr.bf16.mxu0 0
        %915 = vmatpush1.bf16.msra.mxu0 %v855
        %916 = vmatprep.subr.bf16.mxu0 0
        %917 = vmatpush1.bf16.msra.mxu0 %v854
        %918 = vmatprep.subr.bf16.mxu0 0
        %919 = vmatpush2.bf16.msra.mxu0 %v869
        %920 = vmatprep.subr.bf16.mxu0 0
        %921 = vmatpush2.bf16.msra.mxu0 %v868
        %922 = vmatprep.subr.bf16.mxu0 0
        %923 = vmatpush2.bf16.msra.mxu0 %v867
        %924 = vmatprep.subr.bf16.mxu0 0
        %925 = vmatpush2.bf16.msra.mxu0 %v866
        %926 = vmatprep.subr.bf16.mxu0 0
        %927 = vmatpush2.bf16.msra.mxu0 %v865
        %928 = vmatprep.subr.bf16.mxu0 0
        %929 = vmatpush2.bf16.msra.mxu0 %v864
        %930 = vmatprep.subr.bf16.mxu0 0
        %931 = vmatpush2.bf16.msra.mxu0 %v863
        %932 = vmatprep.subr.bf16.mxu0 0
        %933 = vmatpush2.bf16.msra.mxu0 %v862
        %934 = vmatprep.mubr.bf16.mxu0 %v731
        %935 = vmatmul.mubr.bf16.gmra.mxu0 %v730
        %v936 = vpop.f32.mrf.mxu0
        %v937 = vadd.f32 %v781, %v936
        %v938 = vpop.f32.mrf.mxu0
        %v939 = vpop.f32.mrf.mxu0
        %v940 = vadd.f32 %v781, %v939
        %v941 = vpop.f32.mrf.mxu0
        %942 = vmatprep.mubr.bf16.mxu0 %v734
        %943 = vmatmul.mubr.bf16.gmra.mxu0 %v733
        %v944 = vpop.f32.mrf.mxu0
        %v945 = vadd.f32 %v781, %v944
        %v946 = vpop.f32.mrf.mxu0
        %v947 = vpop.f32.mrf.mxu0
        %v948 = vadd.f32 %v781, %v947
        %v949 = vpop.f32.mrf.mxu0
        %950 = vmatprep.mubr.bf16.mxu0 %v737
        %951 = vmatmul.mubr.bf16.gmra.mxu0 %v736
        %v952 = vpop.f32.mrf.mxu0
        %v953 = vadd.f32 %v781, %v952
        %v954 = vpop.f32.mrf.mxu0
        %v955 = vpop.f32.mrf.mxu0
        %v956 = vadd.f32 %v781, %v955
        %v957 = vpop.f32.mrf.mxu0
        %958 = vmatprep.mubr.bf16.mxu0 %v740
        %959 = vmatmul.mubr.bf16.gmra.mxu0 %v739
        %v960 = vpop.f32.mrf.mxu0
        %v961 = vadd.f32 %v781, %v960
        %v962 = vpop.f32.mrf.mxu0
        %v963 = vpop.f32.mrf.mxu0
        %v964 = vadd.f32 %v781, %v963
        %v965 = vpop.f32.mrf.mxu0
        %966 = vdwg.mxu0
        %967 = vmatprep.subr.bf16.mxu0 0
        %968 = vmatpush1.bf16.msra.mxu0 0
        %969 = vmatprep.subr.bf16.mxu0 0
        %970 = vmatpush1.bf16.msra.mxu0 0
        %971 = vmatprep.subr.bf16.mxu0 0
        %972 = vmatpush1.bf16.msra.mxu0 0
        %973 = vmatprep.subr.bf16.mxu0 0
        %974 = vmatpush1.bf16.msra.mxu0 0
        %975 = vmatprep.subr.bf16.mxu0 0
        %976 = vmatpush1.bf16.msra.mxu0 0
        %977 = vmatprep.subr.bf16.mxu0 0
        %978 = vmatpush1.bf16.msra.mxu0 0
        %979 = vmatprep.subr.bf16.mxu0 0
        %980 = vmatpush1.bf16.msra.mxu0 %v871
        %981 = vmatprep.subr.bf16.mxu0 0
        %982 = vmatpush1.bf16.msra.mxu0 %v870
        %983 = vmatprep.subr.bf16.mxu0 0
        %984 = vmatpush2.bf16.msra.mxu0 0
        %985 = vmatprep.subr.bf16.mxu0 0
        %986 = vmatpush2.bf16.msra.mxu0 0
        %987 = vmatprep.subr.bf16.mxu0 0
        %988 = vmatpush2.bf16.msra.mxu0 0
        %989 = vmatprep.subr.bf16.mxu0 0
        %990 = vmatpush2.bf16.msra.mxu0 0
        %991 = vmatprep.subr.bf16.mxu0 0
        %992 = vmatpush2.bf16.msra.mxu0 0
        %993 = vmatprep.subr.bf16.mxu0 0
        %994 = vmatpush2.bf16.msra.mxu0 0
        %995 = vmatprep.subr.bf16.mxu0 0
        %996 = vmatpush2.bf16.msra.mxu0 0
        %997 = vmatprep.subr.bf16.mxu0 0
        %998 = vmatpush2.bf16.msra.mxu0 0
        %999 = vmatprep.mubr.bf16.mxu0 0
        %1000 = vmatmul.mubr.bf16.gmra.mxu0 %v891
        %v1001 = vpop.f32.mrf.mxu0
        %v1002 = vadd.f32 %v937, %v1001
        %v1003 = vpop.f32.mrf.mxu0
        %v1004 = vpop.f32.mrf.mxu0
        %v1005 = vadd.f32 %v940, %v1004
        %v1006 = vpop.f32.mrf.mxu0
        %1007 = vmatprep.mubr.bf16.mxu0 0
        %1008 = vmatmul.mubr.bf16.gmra.mxu0 %v894
        %v1009 = vpop.f32.mrf.mxu0
        %v1010 = vadd.f32 %v945, %v1009
        %v1011 = vpop.f32.mrf.mxu0
        %v1012 = vpop.f32.mrf.mxu0
        %v1013 = vadd.f32 %v948, %v1012
        %v1014 = vpop.f32.mrf.mxu0
        %1015 = vmatprep.mubr.bf16.mxu0 0
        %1016 = vmatmul.mubr.bf16.gmra.mxu0 %v897
        %v1017 = vpop.f32.mrf.mxu0
        %v1018 = vadd.f32 %v953, %v1017
        %v1019 = vpop.f32.mrf.mxu0
        %v1020 = vpop.f32.mrf.mxu0
        %v1021 = vadd.f32 %v956, %v1020
        %v1022 = vpop.f32.mrf.mxu0
        %1023 = vmatprep.mubr.bf16.mxu0 0
        %1024 = vmatmul.mubr.bf16.gmra.mxu0 %v900
        %v1025 = vpop.f32.mrf.mxu0
        %v1026 = vadd.f32 %v961, %v1025
        %v1027 = vpop.f32.mrf.mxu0
        %v1028 = vpop.f32.mrf.mxu0
        %v1029 = vadd.f32 %v964, %v1028
        %v1030 = vpop.f32.mrf.mxu0
        %1031 = vdwg.mxu0
        %v1032 = vmul.f32 %v1002, 0.2
        %v1033 = vmul.f32 %v1005, 0.2
        %v1034 = vmul.f32 %v1010, 0.2
        %v1035 = vmul.f32 %v1013, 0.2
        %v1036 = vmul.f32 %v1018, 0.2
        %v1037 = vmul.f32 %v1021, 0.2
        %v1038 = vmul.f32 %v1026, 0.2
        %v1039 = vmul.f32 %v1029, 0.2
        %v1040 = vmax.f32 %v1002, %v1032
        %v1041 = vmax.f32 %v1005, %v1033
        %v1042 = vmax.f32 %v1010, %v1034
        %v1043 = vmax.f32 %v1013, %v1035
        %v1044 = vmax.f32 %v1018, %v1036
        %v1045 = vmax.f32 %v1021, %v1037
        %v1046 = vmax.f32 %v1026, %v1038
        %v1047 = vmax.f32 %v1029, %v1039
        %v1048 = vadd.f32 %v1040, %v349
        %v1049 = vadd.f32 %v1041, %v352
        %v1050 = vadd.f32 %v1042, %v357
        %v1051 = vadd.f32 %v1043, %v360
        %v1052 = vadd.f32 %v1044, %v365
        %v1053 = vadd.f32 %v1045, %v368
        %v1054 = vadd.f32 %v1046, %v373
        %v1055 = vadd.f32 %v1047, %v376
        %v1056 = vld [vmem:[%s3 + $0x4] sm:$0x1]
        %v1057 = vld [vmem:[%s3 + $0x5] sm:$0x1]
        %v1058 = vld [vmem:[%s3 + $0x6] sm:$0x1]
        %v1059 = vlaneseq
        %v1060 = vshrl.u32 %v1059, 7
        %v1061 = vsub.s32 0, %v1060
        %v1062 = vrot.slane %v1056, %v1061
        %v1063 = vmul.f32 %v1048, %v1062
        %v1064 = vmul.f32 %v1049, %v1062
        %v1065 = vmul.f32 %v1050, %v1062
        %v1066 = vmul.f32 %v1051, %v1062
        %v1067 = vmul.f32 %v1052, %v1062
        %v1068 = vmul.f32 %v1053, %v1062
        %v1069 = vmul.f32 %v1054, %v1062
        %v1070 = vmul.f32 %v1055, %v1062
        %v1071 = vlaneseq
        %v1072 = vshrl.u32 %v1071, 7
        %v1073 = vsub.s32 0, %v1072
        %v1074 = vrot.slane %v1057, %v1073
        %v1075 = vadd.f32 %v1063, %v1074
        %v1076 = vadd.f32 %v1064, %v1074
        %v1077 = vadd.f32 %v1065, %v1074
        %v1078 = vadd.f32 %v1066, %v1074
        %v1079 = vadd.f32 %v1067, %v1074
        %v1080 = vadd.f32 %v1068, %v1074
        %v1081 = vadd.f32 %v1069, %v1074
        %v1082 = vadd.f32 %v1070, %v1074
        %1083 = vst.msk [vmem:[%s406 + $0x1] sm:$0xff] %vm197, %v1075
        %1084 = vst.msk [vmem:[%s406 + $0x11] sm:$0xff] %vm197, %v1076
        %1085 = vst.msk [vmem:[%s406 + $0x21] sm:$0xff] %vm197, %v1077
        %1086 = vst.msk [vmem:[%s406 + $0x31] sm:$0xff] %vm197, %v1078
        %1087 = vst.msk [vmem:[%s406 + $0x41] sm:$0xff] %vm197, %v1079
        %1088 = vst.msk [vmem:[%s406 + $0x51] sm:$0xff] %vm197, %v1080
        %1089 = vst.msk [vmem:[%s406 + $0x61] sm:$0xff] %vm197, %v1081
        %1090 = vst.msk [vmem:[%s406 + $0x71] sm:$0xff] %vm197, %v1082
        %v1091 = vld [vmem:[#allocation2] sm:$0xff]
        %v1092 = vld [vmem:[#allocation2 + $0x10] sm:$0xff]
        %v1093 = vld [vmem:[#allocation2 + $0x20] sm:$0xff]
        %v1094 = vld [vmem:[#allocation2 + $0x30] sm:$0xff]
        %v1095 = vld [vmem:[#allocation2 + $0x40] sm:$0xff]
        %v1096 = vld [vmem:[#allocation2 + $0x50] sm:$0xff]
        %v1097 = vld [vmem:[#allocation2 + $0x60] sm:$0xff]
        %v1098 = vld [vmem:[#allocation2 + $0x70] sm:$0xff]
        %v1099 = vld [vmem:[#allocation2 + $0x1] sm:$0xff]
        %v1100 = vld [vmem:[#allocation2 + $0x11] sm:$0xff]
        %v1101 = vld [vmem:[#allocation2 + $0x21] sm:$0xff]
        %v1102 = vld [vmem:[#allocation2 + $0x31] sm:$0xff]
        %v1103 = vld [vmem:[#allocation2 + $0x41] sm:$0xff]
        %v1104 = vld [vmem:[#allocation2 + $0x51] sm:$0xff]
        %v1105 = vld [vmem:[#allocation2 + $0x61] sm:$0xff]
        %v1106 = vld [vmem:[#allocation2 + $0x71] sm:$0xff]
        %v1107 = vld [vmem:[#allocation2 + $0x2] sm:$0xff]
        %v1108 = vld [vmem:[#allocation2 + $0x12] sm:$0xff]
        %v1109 = vld [vmem:[#allocation2 + $0x22] sm:$0xff]
        %v1110 = vld [vmem:[#allocation2 + $0x32] sm:$0xff]
        %v1111 = vld [vmem:[#allocation2 + $0x42] sm:$0xff]
        %v1112 = vld [vmem:[#allocation2 + $0x52] sm:$0xff]
        %v1113 = vld [vmem:[#allocation2 + $0x62] sm:$0xff]
        %v1114 = vld [vmem:[#allocation2 + $0x72] sm:$0xff]
        %v1115 = vld [vmem:[%s406] sm:$0xff]
        %v1116 = vld [vmem:[%s406 + $0x10] sm:$0xff]
        %v1117 = vld [vmem:[%s406 + $0x20] sm:$0xff]
        %v1118 = vld [vmem:[%s406 + $0x30] sm:$0xff]
        %v1119 = vld [vmem:[%s406 + $0x40] sm:$0xff]
        %v1120 = vld [vmem:[%s406 + $0x50] sm:$0xff]
        %v1121 = vld [vmem:[%s406 + $0x60] sm:$0xff]
        %v1122 = vld [vmem:[%s406 + $0x70] sm:$0xff]
        %v1123 = vld [vmem:[%s406 + $0x1] sm:$0xff]
        %v1124 = vld [vmem:[%s406 + $0x11] sm:$0xff]
        %v1125 = vld [vmem:[%s406 + $0x21] sm:$0xff]
        %v1126 = vld [vmem:[%s406 + $0x31] sm:$0xff]
        %v1127 = vld [vmem:[%s406 + $0x41] sm:$0xff]
        %v1128 = vld [vmem:[%s406 + $0x51] sm:$0xff]
        %v1129 = vld [vmem:[%s406 + $0x61] sm:$0xff]
        %v1130 = vld [vmem:[%s406 + $0x71] sm:$0xff]
        %v1131 = vld [vmem:[%s406 + $0x2] sm:$0xff]
        %v1132 = vld [vmem:[%s406 + $0x12] sm:$0xff]
        %v1133 = vld [vmem:[%s406 + $0x22] sm:$0xff]
        %v1134 = vld [vmem:[%s406 + $0x32] sm:$0xff]
        %v1135 = vld [vmem:[%s406 + $0x42] sm:$0xff]
        %v1136 = vld [vmem:[%s406 + $0x52] sm:$0xff]
        %v1137 = vld [vmem:[%s406 + $0x62] sm:$0xff]
        %v1138 = vld [vmem:[%s406 + $0x72] sm:$0xff]
        %v1139 = vld [vmem:[%s463] sm:$0xff]
        %v1140 = vld [vmem:[%s463 + $0x10] sm:$0xff]
        %v1141 = vld [vmem:[%s463 + $0x20] sm:$0xff]
        %v1142 = vld [vmem:[%s463 + $0x30] sm:$0xff]
        %v1143 = vld [vmem:[%s463 + $0x40] sm:$0xff]
        %v1144 = vld [vmem:[%s463 + $0x50] sm:$0xff]
        %v1145 = vld [vmem:[%s463 + $0x60] sm:$0xff]
        %v1146 = vld [vmem:[%s463 + $0x70] sm:$0xff]
        %v1147 = vld [vmem:[%s463 + $0x1] sm:$0xff]
        %v1148 = vld [vmem:[%s463 + $0x11] sm:$0xff]
        %v1149 = vld [vmem:[%s463 + $0x21] sm:$0xff]
        %v1150 = vld [vmem:[%s463 + $0x31] sm:$0xff]
        %v1151 = vld [vmem:[%s463 + $0x41] sm:$0xff]
        %v1152 = vld [vmem:[%s463 + $0x51] sm:$0xff]
        %v1153 = vld [vmem:[%s463 + $0x61] sm:$0xff]
        %v1154 = vld [vmem:[%s463 + $0x71] sm:$0xff]
        %v1155 = vld [vmem:[%s463 + $0x2] sm:$0xff]
        %v1156 = vld [vmem:[%s463 + $0x12] sm:$0xff]
        %v1157 = vld [vmem:[%s463 + $0x22] sm:$0xff]
        %v1158 = vld [vmem:[%s463 + $0x32] sm:$0xff]
        %v1159 = vld [vmem:[%s463 + $0x42] sm:$0xff]
        %v1160 = vld [vmem:[%s463 + $0x52] sm:$0xff]
        %v1161 = vld [vmem:[%s463 + $0x62] sm:$0xff]
        %v1162 = vld [vmem:[%s463 + $0x72] sm:$0xff]
        %1171 = vrot.lane.b32.xlu0 %v1099, 32
        %v1172 = vpop.permute.xlu0 %1171
        %1173 = vrot.lane.b32.xlu0 %v1100, 32
        %v1174 = vpop.permute.xlu0 %1173
        %1175 = vrot.lane.b32.xlu0 %v1101, 32
        %v1176 = vpop.permute.xlu0 %1175
        %1177 = vrot.lane.b32.xlu0 %v1102, 32
        %v1178 = vpop.permute.xlu0 %1177
        %1179 = vrot.lane.b32.xlu0 %v1103, 32
        %v1180 = vpop.permute.xlu0 %1179
        %1181 = vrot.lane.b32.xlu0 %v1104, 32
        %v1182 = vpop.permute.xlu0 %1181
        %1183 = vrot.lane.b32.xlu0 %v1105, 32
        %v1184 = vpop.permute.xlu0 %1183
        %1185 = vrot.lane.b32.xlu0 %v1106, 32
        %v1186 = vpop.permute.xlu0 %1185
        %1203 = vrot.lane.b32.xlu0 %v1107, 64
        %v1204 = vpop.permute.xlu0 %1203
        %1205 = vrot.lane.b32.xlu0 %v1108, 64
        %v1206 = vpop.permute.xlu0 %1205
        %1207 = vrot.lane.b32.xlu0 %v1109, 64
        %v1208 = vpop.permute.xlu0 %1207
        %1209 = vrot.lane.b32.xlu0 %v1110, 64
        %v1210 = vpop.permute.xlu0 %1209
        %1211 = vrot.lane.b32.xlu0 %v1111, 64
        %v1212 = vpop.permute.xlu0 %1211
        %1213 = vrot.lane.b32.xlu0 %v1112, 64
        %v1214 = vpop.permute.xlu0 %1213
        %1215 = vrot.lane.b32.xlu0 %v1113, 64
        %v1216 = vpop.permute.xlu0 %1215
        %1217 = vrot.lane.b32.xlu0 %v1114, 64
        %v1218 = vpop.permute.xlu0 %1217
        %1235 = vrot.lane.b32.xlu0 %v1115, 96
        %v1236 = vpop.permute.xlu0 %1235
        %1237 = vrot.lane.b32.xlu0 %v1116, 96
        %v1238 = vpop.permute.xlu0 %1237
        %1239 = vrot.lane.b32.xlu0 %v1117, 96
        %v1240 = vpop.permute.xlu0 %1239
        %1241 = vrot.lane.b32.xlu0 %v1118, 96
        %v1242 = vpop.permute.xlu0 %1241
        %1243 = vrot.lane.b32.xlu0 %v1119, 96
        %v1244 = vpop.permute.xlu0 %1243
        %1245 = vrot.lane.b32.xlu0 %v1120, 96
        %v1246 = vpop.permute.xlu0 %1245
        %1247 = vrot.lane.b32.xlu0 %v1121, 96
        %v1248 = vpop.permute.xlu0 %1247
        %1249 = vrot.lane.b32.xlu0 %v1122, 96
        %v1250 = vpop.permute.xlu0 %1249
        %1267 = vrot.lane.b32.xlu0 %v1131, 32
        %v1268 = vpop.permute.xlu0 %1267
        %1269 = vrot.lane.b32.xlu0 %v1132, 32
        %v1270 = vpop.permute.xlu0 %1269
        %1271 = vrot.lane.b32.xlu0 %v1133, 32
        %v1272 = vpop.permute.xlu0 %1271
        %1273 = vrot.lane.b32.xlu0 %v1134, 32
        %v1274 = vpop.permute.xlu0 %1273
        %1275 = vrot.lane.b32.xlu0 %v1135, 32
        %v1276 = vpop.permute.xlu0 %1275
        %1277 = vrot.lane.b32.xlu0 %v1136, 32
        %v1278 = vpop.permute.xlu0 %1277
        %1279 = vrot.lane.b32.xlu0 %v1137, 32
        %v1280 = vpop.permute.xlu0 %1279
        %1281 = vrot.lane.b32.xlu0 %v1138, 32
        %v1282 = vpop.permute.xlu0 %1281
        %1299 = vrot.lane.b32.xlu0 %v1139, 64
        %v1300 = vpop.permute.xlu0 %1299
        %1301 = vrot.lane.b32.xlu0 %v1140, 64
        %v1302 = vpop.permute.xlu0 %1301
        %1303 = vrot.lane.b32.xlu0 %v1141, 64
        %v1304 = vpop.permute.xlu0 %1303
        %1305 = vrot.lane.b32.xlu0 %v1142, 64
        %v1306 = vpop.permute.xlu0 %1305
        %1307 = vrot.lane.b32.xlu0 %v1143, 64
        %v1308 = vpop.permute.xlu0 %1307
        %1309 = vrot.lane.b32.xlu0 %v1144, 64
        %v1310 = vpop.permute.xlu0 %1309
        %1311 = vrot.lane.b32.xlu0 %v1145, 64
        %v1312 = vpop.permute.xlu0 %1311
        %1313 = vrot.lane.b32.xlu0 %v1146, 64
        %v1314 = vpop.permute.xlu0 %1313
        %1331 = vrot.lane.b32.xlu0 %v1147, 96
        %v1332 = vpop.permute.xlu0 %1331
        %1333 = vrot.lane.b32.xlu0 %v1148, 96
        %v1334 = vpop.permute.xlu0 %1333
        %1335 = vrot.lane.b32.xlu0 %v1149, 96
        %v1336 = vpop.permute.xlu0 %1335
        %1337 = vrot.lane.b32.xlu0 %v1150, 96
        %v1338 = vpop.permute.xlu0 %1337
        %1339 = vrot.lane.b32.xlu0 %v1151, 96
        %v1340 = vpop.permute.xlu0 %1339
        %1341 = vrot.lane.b32.xlu0 %v1152, 96
        %v1342 = vpop.permute.xlu0 %1341
        %1343 = vrot.lane.b32.xlu0 %v1153, 96
        %v1344 = vpop.permute.xlu0 %1343
        %1345 = vrot.lane.b32.xlu0 %v1154, 96
        %v1346 = vpop.permute.xlu0 %1345
        %v1355 = vsel %vm197, %v1091, %v1172
        %v1356 = vsel %vm197, %v1092, %v1174
        %v1357 = vsel %vm197, %v1093, %v1176
        %v1358 = vsel %vm197, %v1094, %v1178
        %v1359 = vsel %vm197, %v1095, %v1180
        %v1360 = vsel %vm197, %v1096, %v1182
        %v1361 = vsel %vm197, %v1097, %v1184
        %v1362 = vsel %vm197, %v1098, %v1186
        %v1363 = vsel %vm688, %v1355, %v1204
        %v1364 = vsel %vm688, %v1356, %v1206
        %v1365 = vsel %vm688, %v1357, %v1208
        %v1366 = vsel %vm688, %v1358, %v1210
        %v1367 = vsel %vm688, %v1359, %v1212
        %v1368 = vsel %vm688, %v1360, %v1214
        %v1369 = vsel %vm688, %v1361, %v1216
        %v1370 = vsel %vm688, %v1362, %v1218
        %v1371 = vsel %vm697, %v1363, %v1236
        %v1372 = vsel %vm697, %v1364, %v1238
        %v1373 = vsel %vm697, %v1365, %v1240
        %v1374 = vsel %vm697, %v1366, %v1242
        %v1375 = vsel %vm697, %v1367, %v1244
        %v1376 = vsel %vm697, %v1368, %v1246
        %v1377 = vsel %vm697, %v1369, %v1248
        %v1378 = vsel %vm697, %v1370, %v1250
        %v1379 = vsel %vm197, %v1123, %v1268
        %v1380 = vsel %vm197, %v1124, %v1270
        %v1381 = vsel %vm197, %v1125, %v1272
        %v1382 = vsel %vm197, %v1126, %v1274
        %v1383 = vsel %vm197, %v1127, %v1276
        %v1384 = vsel %vm197, %v1128, %v1278
        %v1385 = vsel %vm197, %v1129, %v1280
        %v1386 = vsel %vm197, %v1130, %v1282
        %v1387 = vsel %vm688, %v1379, %v1300
        %v1388 = vsel %vm688, %v1380, %v1302
        %v1389 = vsel %vm688, %v1381, %v1304
        %v1390 = vsel %vm688, %v1382, %v1306
        %v1391 = vsel %vm688, %v1383, %v1308
        %v1392 = vsel %vm688, %v1384, %v1310
        %v1393 = vsel %vm688, %v1385, %v1312
        %v1394 = vsel %vm688, %v1386, %v1314
        %v1395 = vsel %vm697, %v1387, %v1332
        %v1396 = vsel %vm697, %v1388, %v1334
        %v1397 = vsel %vm697, %v1389, %v1336
        %v1398 = vsel %vm697, %v1390, %v1338
        %v1399 = vsel %vm697, %v1391, %v1340
        %v1400 = vsel %vm697, %v1392, %v1342
        %v1401 = vsel %vm697, %v1393, %v1344
        %v1402 = vsel %vm697, %v1394, %v1346
        %v1403 = vpack.c.bf16 %v1372, %v1371
        %v1404 = vpack.c.bf16 %v1396, %v1395
        %v1405 = vpack.c.bf16 %v1156, %v1155
        %v1406 = vpack.c.bf16 %v1374, %v1373
        %v1407 = vpack.c.bf16 %v1398, %v1397
        %v1408 = vpack.c.bf16 %v1158, %v1157
        %v1409 = vpack.c.bf16 %v1376, %v1375
        %v1410 = vpack.c.bf16 %v1400, %v1399
        %v1411 = vpack.c.bf16 %v1160, %v1159
        %v1412 = vpack.c.bf16 %v1378, %v1377
        %v1413 = vpack.c.bf16 %v1402, %v1401
        %v1414 = vpack.c.bf16 %v1162, %v1161
        %s1415 = scalar_lea.vmem %s2, 144
        %v1416 = vld [vmem:[%s1415] sm:$0xf]
        %v1417 = vld [vmem:[%s1415 + $0x4] sm:$0xf]
        %v1418 = vld [vmem:[%s1415 + $0x8] sm:$0xf]
        %v1419 = vld [vmem:[%s1415 + $0xc] sm:$0xf]
        %v1420 = vld [vmem:[%s1415 + $0x10] sm:$0xf]
        %v1421 = vld [vmem:[%s1415 + $0x14] sm:$0xf]
        %v1422 = vld [vmem:[%s1415 + $0x18] sm:$0xf]
        %v1423 = vld [vmem:[%s1415 + $0x1c] sm:$0xf]
        %v1424 = vld [vmem:[%s1415 + $0x20] sm:$0xf]
        %v1425 = vld [vmem:[%s1415 + $0x24] sm:$0xf]
        %v1426 = vld [vmem:[%s1415 + $0x28] sm:$0xf]
        %v1427 = vld [vmem:[%s1415 + $0x2c] sm:$0xf]
        %v1428 = vld [vmem:[%s1415 + $0x30] sm:$0xf]
        %v1429 = vld [vmem:[%s1415 + $0x34] sm:$0xf]
        %v1430 = vld [vmem:[%s1415 + $0x38] sm:$0xf]
        %v1431 = vld [vmem:[%s1415 + $0x3c] sm:$0xf]
        %v1432 = vld [vmem:[%s1415 + $0x40] sm:$0xf]
        %v1433 = vld [vmem:[%s1415 + $0x44] sm:$0xf]
        %v1434 = vld [vmem:[%s1415 + $0x48] sm:$0xf]
        %v1435 = vld [vmem:[%s1415 + $0x4c] sm:$0xf]
        %v1436 = vld [vmem:[%s1415 + $0x50] sm:$0xf]
        %v1437 = vld [vmem:[%s1415 + $0x54] sm:$0xf]
        %v1438 = vld [vmem:[%s1415 + $0x58] sm:$0xf]
        %v1439 = vld [vmem:[%s1415 + $0x5c] sm:$0xf]
        %v1440 = vld [vmem:[%s1415 + $0x60] sm:$0xf]
        %v1441 = vld [vmem:[%s1415 + $0x64] sm:$0xf]
        %v1442 = vld [vmem:[%s1415 + $0x68] sm:$0xf]
        %v1443 = vld [vmem:[%s1415 + $0x6c] sm:$0xf]
        %v1444 = vld [vmem:[%s1415 + $0x70] sm:$0xf]
        %v1445 = vld [vmem:[%s1415 + $0x74] sm:$0xf]
        %v1446 = vld [vmem:[%s1415 + $0x78] sm:$0xf]
        %v1447 = vld [vmem:[%s1415 + $0x7c] sm:$0xf]
        %v1448 = vld [vmem:[%s1415 + $0x80] sm:$0xf]
        %v1449 = vld [vmem:[%s1415 + $0x84] sm:$0xf]
        %v1450 = vld [vmem:[%s1415 + $0x88] sm:$0xf]
        %v1451 = vld [vmem:[%s1415 + $0x8c] sm:$0xf]
        %v1452 = vlaneseq
        %v1453 = vshrl.u32 %v1452, 7
        %v1454 = vsub.s32 0, %v1453
        %v1455 = vrot.slane %v1058, %v1454
        %v1492 = vunpack.c.l.b16 %v1416
        %v1493 = vunpack.c.l.b16 %v1417
        %v1494 = vunpack.c.l.b16 %v1418
        %v1495 = vunpack.c.l.b16 %v1419
        %v1496 = vunpack.c.l.b16 %v1420
        %v1497 = vunpack.c.l.b16 %v1421
        %v1498 = vunpack.c.l.b16 %v1422
        %v1499 = vunpack.c.l.b16 %v1423
        %v1500 = vunpack.c.l.b16 %v1424
        %v1501 = vunpack.c.l.b16 %v1425
        %v1502 = vunpack.c.l.b16 %v1426
        %v1503 = vunpack.c.l.b16 %v1427
        %v1504 = vunpack.c.l.b16 %v1428
        %v1505 = vunpack.c.l.b16 %v1429
        %v1506 = vunpack.c.l.b16 %v1430
        %v1507 = vunpack.c.l.b16 %v1431
        %v1508 = vunpack.c.l.b16 %v1432
        %v1509 = vunpack.c.l.b16 %v1433
        %v1510 = vunpack.c.l.b16 %v1434
        %v1511 = vunpack.c.l.b16 %v1435
        %v1512 = vunpack.c.l.b16 %v1436
        %v1513 = vunpack.c.l.b16 %v1437
        %v1514 = vunpack.c.l.b16 %v1438
        %v1515 = vunpack.c.l.b16 %v1439
        %v1516 = vunpack.c.l.b16 %v1440
        %v1517 = vunpack.c.l.b16 %v1441
        %v1518 = vunpack.c.l.b16 %v1442
        %v1519 = vunpack.c.l.b16 %v1443
        %v1520 = vunpack.c.l.b16 %v1444
        %v1521 = vunpack.c.l.b16 %v1445
        %v1522 = vunpack.c.l.b16 %v1446
        %v1523 = vunpack.c.l.b16 %v1447
        %v1524 = vunpack.c.l.b16 %v1448
        %v1525 = vunpack.c.l.b16 %v1449
        %v1526 = vunpack.c.l.b16 %v1450
        %v1527 = vunpack.c.l.b16 %v1451
        %v1528 = vpack.c.b16 %v1493, %v1492
        %v1529 = vpack.c.b16 %v1495, %v1494
        %v1530 = vpack.c.b16 %v1497, %v1496
        %v1531 = vpack.c.b16 %v1499, %v1498
        %v1532 = vpack.c.b16 %v1501, %v1500
        %v1533 = vpack.c.b16 %v1503, %v1502
        %v1534 = vpack.c.b16 %v1505, %v1504
        %v1535 = vpack.c.b16 %v1507, %v1506
        %v1536 = vpack.c.b16 %v1509, %v1508
        %v1537 = vpack.c.b16 %v1511, %v1510
        %v1538 = vpack.c.b16 %v1513, %v1512
        %v1539 = vpack.c.b16 %v1515, %v1514
        %v1540 = vpack.c.b16 %v1517, %v1516
        %v1541 = vpack.c.b16 %v1519, %v1518
        %v1542 = vpack.c.b16 %v1521, %v1520
        %v1543 = vpack.c.b16 %v1523, %v1522
        %v1544 = vpack.c.b16 %v1525, %v1524
        %v1545 = vpack.c.b16 %v1527, %v1526
        %v1565 = vsel %vm197, %v1405, 0
        %v1568 = vsel %vm197, %v1408, 0
        %v1571 = vsel %vm197, %v1411, 0
        %v1574 = vsel %vm197, %v1414, 0
        %1576 = vmatprep.subr.bf16.mxu0 0
        %1577 = vmatpush1.bf16.msra.mxu0 %v1535
        %1578 = vmatprep.subr.bf16.mxu0 0
        %1579 = vmatpush1.bf16.msra.mxu0 %v1534
        %1580 = vmatprep.subr.bf16.mxu0 0
        %1581 = vmatpush1.bf16.msra.mxu0 %v1533
        %1582 = vmatprep.subr.bf16.mxu0 0
        %1583 = vmatpush1.bf16.msra.mxu0 %v1532
        %1584 = vmatprep.subr.bf16.mxu0 0
        %1585 = vmatpush1.bf16.msra.mxu0 %v1531
        %1586 = vmatprep.subr.bf16.mxu0 0
        %1587 = vmatpush1.bf16.msra.mxu0 %v1530
        %1588 = vmatprep.subr.bf16.mxu0 0
        %1589 = vmatpush1.bf16.msra.mxu0 %v1529
        %1590 = vmatprep.subr.bf16.mxu0 0
        %1591 = vmatpush1.bf16.msra.mxu0 %v1528
        %1592 = vmatprep.subr.bf16.mxu0 0
        %1593 = vmatpush2.bf16.msra.mxu0 %v1543
        %1594 = vmatprep.subr.bf16.mxu0 0
        %1595 = vmatpush2.bf16.msra.mxu0 %v1542
        %1596 = vmatprep.subr.bf16.mxu0 0
        %1597 = vmatpush2.bf16.msra.mxu0 %v1541
        %1598 = vmatprep.subr.bf16.mxu0 0
        %1599 = vmatpush2.bf16.msra.mxu0 %v1540
        %1600 = vmatprep.subr.bf16.mxu0 0
        %1601 = vmatpush2.bf16.msra.mxu0 %v1539
        %1602 = vmatprep.subr.bf16.mxu0 0
        %1603 = vmatpush2.bf16.msra.mxu0 %v1538
        %1604 = vmatprep.subr.bf16.mxu0 0
        %1605 = vmatpush2.bf16.msra.mxu0 %v1537
        %1606 = vmatprep.subr.bf16.mxu0 0
        %1607 = vmatpush2.bf16.msra.mxu0 %v1536
        %1608 = vmatprep.mubr.bf16.mxu0 %v1404
        %1609 = vmatmul.mubr.bf16.gmra.mxu0 %v1403
        %v1610 = vpop.f32.mrf.mxu0
        %v1611 = vadd.f32 %v1455, %v1610
        %v1612 = vpop.f32.mrf.mxu0
        %v1613 = vpop.f32.mrf.mxu0
        %v1614 = vadd.f32 %v1455, %v1613
        %v1615 = vpop.f32.mrf.mxu0
        %1616 = vmatprep.mubr.bf16.mxu0 %v1407
        %1617 = vmatmul.mubr.bf16.gmra.mxu0 %v1406
        %v1618 = vpop.f32.mrf.mxu0
        %v1619 = vadd.f32 %v1455, %v1618
        %v1620 = vpop.f32.mrf.mxu0
        %v1621 = vpop.f32.mrf.mxu0
        %v1622 = vadd.f32 %v1455, %v1621
        %v1623 = vpop.f32.mrf.mxu0
        %1624 = vmatprep.mubr.bf16.mxu0 %v1410
        %1625 = vmatmul.mubr.bf16.gmra.mxu0 %v1409
        %v1626 = vpop.f32.mrf.mxu0
        %v1627 = vadd.f32 %v1455, %v1626
        %v1628 = vpop.f32.mrf.mxu0
        %v1629 = vpop.f32.mrf.mxu0
        %v1630 = vadd.f32 %v1455, %v1629
        %v1631 = vpop.f32.mrf.mxu0
        %1632 = vmatprep.mubr.bf16.mxu0 %v1413
        %1633 = vmatmul.mubr.bf16.gmra.mxu0 %v1412
        %v1634 = vpop.f32.mrf.mxu0
        %v1635 = vadd.f32 %v1455, %v1634
        %v1636 = vpop.f32.mrf.mxu0
        %v1637 = vpop.f32.mrf.mxu0
        %v1638 = vadd.f32 %v1455, %v1637
        %v1639 = vpop.f32.mrf.mxu0
        %1640 = vdwg.mxu0
        %1641 = vmatprep.subr.bf16.mxu0 0
        %1642 = vmatpush1.bf16.msra.mxu0 0
        %1643 = vmatprep.subr.bf16.mxu0 0
        %1644 = vmatpush1.bf16.msra.mxu0 0
        %1645 = vmatprep.subr.bf16.mxu0 0
        %1646 = vmatpush1.bf16.msra.mxu0 0
        %1647 = vmatprep.subr.bf16.mxu0 0
        %1648 = vmatpush1.bf16.msra.mxu0 0
        %1649 = vmatprep.subr.bf16.mxu0 0
        %1650 = vmatpush1.bf16.msra.mxu0 0
        %1651 = vmatprep.subr.bf16.mxu0 0
        %1652 = vmatpush1.bf16.msra.mxu0 0
        %1653 = vmatprep.subr.bf16.mxu0 0
        %1654 = vmatpush1.bf16.msra.mxu0 %v1545
        %1655 = vmatprep.subr.bf16.mxu0 0
        %1656 = vmatpush1.bf16.msra.mxu0 %v1544
        %1657 = vmatprep.subr.bf16.mxu0 0
        %1658 = vmatpush2.bf16.msra.mxu0 0
        %1659 = vmatprep.subr.bf16.mxu0 0
        %1660 = vmatpush2.bf16.msra.mxu0 0
        %1661 = vmatprep.subr.bf16.mxu0 0
        %1662 = vmatpush2.bf16.msra.mxu0 0
        %1663 = vmatprep.subr.bf16.mxu0 0
        %1664 = vmatpush2.bf16.msra.mxu0 0
        %1665 = vmatprep.subr.bf16.mxu0 0
        %1666 = vmatpush2.bf16.msra.mxu0 0
        %1667 = vmatprep.subr.bf16.mxu0 0
        %1668 = vmatpush2.bf16.msra.mxu0 0
        %1669 = vmatprep.subr.bf16.mxu0 0
        %1670 = vmatpush2.bf16.msra.mxu0 0
        %1671 = vmatprep.subr.bf16.mxu0 0
        %1672 = vmatpush2.bf16.msra.mxu0 0
        %1673 = vmatprep.mubr.bf16.mxu0 0
        %1674 = vmatmul.mubr.bf16.gmra.mxu0 %v1565
        %v1675 = vpop.f32.mrf.mxu0
        %v1676 = vadd.f32 %v1611, %v1675
        %v1677 = vpop.f32.mrf.mxu0
        %v1678 = vpop.f32.mrf.mxu0
        %v1679 = vadd.f32 %v1614, %v1678
        %v1680 = vpop.f32.mrf.mxu0
        %1681 = vmatprep.mubr.bf16.mxu0 0
        %1682 = vmatmul.mubr.bf16.gmra.mxu0 %v1568
        %v1683 = vpop.f32.mrf.mxu0
        %v1684 = vadd.f32 %v1619, %v1683
        %v1685 = vpop.f32.mrf.mxu0
        %v1686 = vpop.f32.mrf.mxu0
        %v1687 = vadd.f32 %v1622, %v1686
        %v1688 = vpop.f32.mrf.mxu0
        %1689 = vmatprep.mubr.bf16.mxu0 0
        %1690 = vmatmul.mubr.bf16.gmra.mxu0 %v1571
        %v1691 = vpop.f32.mrf.mxu0
        %v1692 = vadd.f32 %v1627, %v1691
        %v1693 = vpop.f32.mrf.mxu0
        %v1694 = vpop.f32.mrf.mxu0
        %v1695 = vadd.f32 %v1630, %v1694
        %v1696 = vpop.f32.mrf.mxu0
        %1697 = vmatprep.mubr.bf16.mxu0 0
        %1698 = vmatmul.mubr.bf16.gmra.mxu0 %v1574
        %v1699 = vpop.f32.mrf.mxu0
        %v1700 = vadd.f32 %v1635, %v1699
        %v1701 = vpop.f32.mrf.mxu0
        %v1702 = vpop.f32.mrf.mxu0
        %v1703 = vadd.f32 %v1638, %v1702
        %v1704 = vpop.f32.mrf.mxu0
        %1705 = vdwg.mxu0
        %v1706 = vmul.f32 %v1676, 0.2
        %v1707 = vmul.f32 %v1679, 0.2
        %v1708 = vmul.f32 %v1684, 0.2
        %v1709 = vmul.f32 %v1687, 0.2
        %v1710 = vmul.f32 %v1692, 0.2
        %v1711 = vmul.f32 %v1695, 0.2
        %v1712 = vmul.f32 %v1700, 0.2
        %v1713 = vmul.f32 %v1703, 0.2
        %v1714 = vmax.f32 %v1676, %v1706
        %v1715 = vmax.f32 %v1679, %v1707
        %v1716 = vmax.f32 %v1684, %v1708
        %v1717 = vmax.f32 %v1687, %v1709
        %v1718 = vmax.f32 %v1692, %v1710
        %v1719 = vmax.f32 %v1695, %v1711
        %v1720 = vmax.f32 %v1700, %v1712
        %v1721 = vmax.f32 %v1703, %v1713
        %v1722 = vadd.f32 %v1714, %v1048
        %v1723 = vadd.f32 %v1715, %v1049
        %v1724 = vadd.f32 %v1716, %v1050
        %v1725 = vadd.f32 %v1717, %v1051
        %v1726 = vadd.f32 %v1718, %v1052
        %v1727 = vadd.f32 %v1719, %v1053
        %v1728 = vadd.f32 %v1720, %v1054
        %v1729 = vadd.f32 %v1721, %v1055
        %1730 = vst.msk [vmem:[%s190] sm:$0xff] %vm197, %v1722
        %1731 = vst.msk [vmem:[%s190 + $0x8] sm:$0xff] %vm197, %v1723
        %1732 = vst.msk [vmem:[%s190 + $0x10] sm:$0xff] %vm197, %v1724
        %1733 = vst.msk [vmem:[%s190 + $0x18] sm:$0xff] %vm197, %v1725
        %1734 = vst.msk [vmem:[%s190 + $0x20] sm:$0xff] %vm197, %v1726
        %1735 = vst.msk [vmem:[%s190 + $0x28] sm:$0xff] %vm197, %v1727
        %1736 = vst.msk [vmem:[%s190 + $0x30] sm:$0xff] %vm197, %v1728
        %1737 = vst.msk [vmem:[%s190 + $0x38] sm:$0xff] %vm197, %v1729
        %s1738 = sand.u32 %s115, 1
        %s1739 = scalar_lea.sflag [#allocation4], %s1738
        %s1740 = sand.u32 %s115, 1
        %s1741 = smul.addr %s1740, 64
        %s1742 = scalar_lea.vmem [#allocation3], %s1741
        // Predicated region
        $region37: #{enc_disc_block.1} parent=35 // pred_check
          %p1743 = pneg %p125
        $region38: #{enc_disc_block.1} parent=35 // pred_check_branch
          %1745 = sbr.rel (%p1743) target = $region40
        $region39: #{enc_disc_block.1} parent=35 // pred_region
          %s1747 = ssub.s32 1024, 1024
          %1748 = vsyncadd %s1739, %s1747
          %s1749 = smul.addr %s18, 8
          %s1750 = smul.addr %s1749, 128
          %s1751 = scalar_lea.hbm %s4, %s1750
          %s1752 = sshll.u32 %s1742, 4
          %s1753 = int_to_ptr.vmem [resolvable:$true] %s1752
          %1758 = dma.vmem_to_hbm [thread:$0]  %s1753, 1024, %s1751, %s1739, 128, 128, 8
        $region40: #{enc_disc_block.1} parent=35 // pred_fallthru
          _
      $region36: #{enc_disc_block.1} parent=5 // pred_fallthru
        _
      %p1759 = scmp.le.s32.totalorder 2, %s13
      // Predicated region
      $region41: #{enc_disc_block.1} parent=5 // pred_check
        %p1760 = pneg %p1759
      $region42: #{enc_disc_block.1} parent=5 // pred_check_branch
        %1762 = sbr.rel (%p1760) target = $region44
      $region43: #{enc_disc_block.1} parent=5 // pred_region
        %s1763 = ssub.s32 %s13, 2
        // Predicated region
        $region45: #{enc_disc_block.1} parent=43 // pred_check
          %p1764 = pneg %p131
        $region46: #{enc_disc_block.1} parent=43 // pred_check_branch
          %1766 = sbr.rel (%p1764) target = $region48
        $region47: #{enc_disc_block.1} parent=43 // pred_region
          %s1767 = sand.u32 %s116, 1
          %s1768 = scalar_lea.sflag [#allocation4], %s1767
          %s1769 = sand.u32 %s116, 1
          %s1770 = smul.addr %s1769, 64
          %s1771 = scalar_lea.vmem [#allocation3], %s1770
          %1772 = dma.done %s1768, 1024
        $region48: #{enc_disc_block.1} parent=43 // pred_fallthru
          _
      $region44: #{enc_disc_block.1} parent=5 // pred_fallthru
        _
    $region6: #{enc_disc_block.1} parent=1 // loop_footer
      %s17 = sadd.s32 1, %s13
    $region7: #{enc_disc_block.1} parent=1 // loop_footer_branch
      %12 = sbr.rel target = $region3
    $region8: #{enc_disc_block.1} parent=1 // loop_exit
      _
    %1773 = vsyncpa [#allocation4], 1
    %s1774 = scalar_lea.sflag [#allocation4], 1
    %1775 = vsyncpa %s1774, 1

</llo_original>
